<compile_context>
chip_gen: v7x
topology: tpu7x:2x2x1
jax: 0.10.0
libtpu: 0.0.40
codegen_flags: <defaults>
</compile_context>

<pallas_src>
import jax
import jax.numpy as jnp
from jax import lax
from jax.experimental import pallas as pl
from jax.experimental.pallas import tpu as pltpu


# ---------------- configuration (small, consistent with the module) ---------
B = 2            # batch
T = 8            # block_size / sequence length
C = 32           # n_embd
H = 4            # n_heads
HS = C // H      # head_size
FF = 4 * C       # MLP hidden
BT = B * T
LN_EPS = 1e-5    # PyTorch nn.LayerNorm default
NEG_INF = -1e30  # large finite negative (safe in f32; exp underflows to 0)

# packed parameter slab layout (all f32, lane width 128):
#   rows [0,   C)        cols [0, 3C)  : Wqkv  (LN1 gamma + attn scale folded)
#   rows [C,   2C)       cols [0, C)   : Wo
#   rows [2C,  3C)       cols [0, FF)  : Wfc   (LN2 gamma folded)
#   rows [3C,  3C+FF)    cols [0, C)   : Wproj
#   row  3C+FF           cols [0, 3C)  : bqkv  (= beta1 @ Wqkv, scale folded)
#   row  3C+FF+1         cols [0, C)   : bo
#   row  3C+FF+2         cols [0, FF)  : bfc   (= bfc + beta2 @ Wfc)
#   row  3C+FF+3         cols [0, C)   : bproj
PACK_W_ROWS = 3 * C + FF          # 224
PACK_ROWS = PACK_W_ROWS + 8       # 232 (sublane-aligned)
PACK_LANES = 128


# ---------------- in-kernel helpers -----------------------------------------
def _normalize(x):
    # LayerNorm without affine (affine folded into the following linear).
    mean = jnp.mean(x, axis=-1, keepdims=True)
    xc = x - mean
    var = jnp.mean(xc * xc, axis=-1, keepdims=True)
    return xc * lax.rsqrt(var + LN_EPS)


def _gelu_tanh(x):
    # GELU(approximate='tanh')
    c = 0.7978845608028654  # sqrt(2/pi)
    return 0.5 * x * (1.0 + jnp.tanh(c * (x + 0.044715 * x * x * x)))


# ---------------- the Pallas kernel ------------------------------------------
def block_kernel(x_ref, w_ref, o_ref):
    x = x_ref[...]                                   # (T, C) f32, one batch row

    # static slices of the packed parameter slab (lane offset always 0)
    wqkv = w_ref[0:C, 0:3 * C]                       # (C, 3C)
    wo = w_ref[C:2 * C, 0:C]                         # (C, C)
    wfc = w_ref[2 * C:3 * C, 0:FF]                   # (C, FF)
    wproj = w_ref[3 * C:3 * C + FF, 0:C]             # (FF, C)
    r = PACK_W_ROWS
    bqkv = w_ref[r:r + 1, 0:3 * C]                   # (1, 3C)
    bo = w_ref[r + 1:r + 2, 0:C]                     # (1, C)
    bfc = w_ref[r + 2:r + 3, 0:FF]                   # (1, FF)
    bproj = w_ref[r + 3:r + 4, 0:C]                  # (1, C)

    # ---- attention branch: ln_1 (folded) -> fused QKV -> causal attn -> proj
    xn1 = _normalize(x)                              # (T, C)
    qkv = jnp.dot(xn1, wqkv, preferred_element_type=jnp.float32) + bqkv  # (T,3C)

    q = qkv[:, 0:C]                                  # scale already folded in
    k = qkv[:, C:2 * C]
    v = qkv[:, 2 * C:3 * C]

    row = lax.broadcasted_iota(jnp.int32, (T, T), 0)
    col = lax.broadcasted_iota(jnp.int32, (T, T), 1)
    causal = row >= col                              # lower-triangular keep-mask

    # per-head scores (unrolled), masked, stacked along sublanes so the whole
    # softmax chain (max / exp / sum / reciprocal) runs once.
    scores = []
    for h in range(H):                               # unrolled, H = 4
        lo, hi = h * HS, (h + 1) * HS
        s = lax.dot_general(q[:, lo:hi], k[:, lo:hi],
                            (((1,), (1,)), ((), ())),
                            preferred_element_type=jnp.float32)   # (T, T)
        scores.append(jnp.where(causal, s, NEG_INF))
    s_all = jnp.concatenate(scores, axis=0)          # (H*T, T)
    s_all = s_all - jnp.max(s_all, axis=-1, keepdims=True)
    p_all = jnp.exp(s_all)
    inv = pl.reciprocal(jnp.sum(p_all, axis=-1, keepdims=True), approx=True)
    wei_all = p_all * inv                            # row-softmax over keys

    # per-head (wei @ v_h) accumulated directly through the matching rows of
    # Wo -- no head concatenation / relayout, identical math to (att @ Wo).
    attn = None
    for h in range(H):                               # unrolled, H = 4
        lo, hi = h * HS, (h + 1) * HS
        wei_h = wei_all[h * T:(h + 1) * T, :]        # (T, T)
        hv = jnp.dot(wei_h, v[:, lo:hi],
                     preferred_element_type=jnp.float32)          # (T, HS)
        contrib = jnp.dot(hv, wo[lo:hi, :],
                          preferred_element_type=jnp.float32)     # (T, C)
        attn = contrib if attn is None else attn + contrib
    x1 = x + attn + bo                               # first residual

    # ---- MLP branch: ln_2 (folded) -> fc -> gelu(tanh) -> proj --------------
    xn2 = _normalize(x1)
    hact = jnp.dot(xn2, wfc, preferred_element_type=jnp.float32) + bfc
    hact = _gelu_tanh(hact)
    mlp_out = jnp.dot(hact, wproj, preferred_element_type=jnp.float32) + bproj

    o_ref[...] = x1 + mlp_out                        # second residual


# ---------------- load-time parameter packing (NOT in the hot path) ----------
def pack_params(params):
    """Fold LN affines + attention scale into the weights and pack everything
    into a single lane-padded (PACK_ROWS, 128) f32 slab. Run once at load."""
    (ln1g, ln1b, wq, wk, wv, wo, bo, ln2g, ln2b, wfc, bfc, wproj, bproj) = params
    scale = float(HS) ** -0.5

    wqkv = jnp.concatenate([wq, wk, wv], axis=1)     # (C, 3C)
    bqkv = ln1b @ wqkv                               # beta1 @ Wqkv   (1, 3C)
    wqkv = ln1g.reshape(C, 1) * wqkv                 # gamma1 fold
    wqkv = wqkv.at[:, 0:C].multiply(scale)           # fold attn scale into Q
    bqkv = bqkv.at[:, 0:C].multiply(scale)

    bfc_eff = ln2b @ wfc + bfc                       # beta2 @ Wfc + bfc
    wfc_eff = ln2g.reshape(C, 1) * wfc               # gamma2 fold

    slab = jnp.zeros((PACK_ROWS, PACK_LANES), jnp.float32)
    slab = slab.at[0:C, 0:3 * C].set(wqkv)
    slab = slab.at[C:2 * C, 0:C].set(wo)
    slab = slab.at[2 * C:3 * C, 0:FF].set(wfc_eff)
    slab = slab.at[3 * C:3 * C + FF, 0:C].set(wproj)
    r = PACK_W_ROWS
    slab = slab.at[r, 0:3 * C].set(bqkv[0])
    slab = slab.at[r + 1, 0:C].set(bo[0])
    slab = slab.at[r + 2, 0:FF].set(bfc_eff[0])
    slab = slab.at[r + 3, 0:C].set(bproj[0])
    return slab


# ---------------- per-call wrapper (hot path: reshape + pallas_call only) ----
@jax.jit
def gpt2_block(x, slab):
    x2d = x.reshape(BT, C)
    out = pl.pallas_call(
        block_kernel,
        out_shape=jax.ShapeDtypeStruct((BT, C), jnp.float32),
        grid=(B,),                                   # batch axis -> megacore on v7x
        in_specs=[
            pl.BlockSpec((T, C), lambda b: (b, 0)),              # x, per-batch
            pl.BlockSpec((PACK_ROWS, PACK_LANES), lambda b: (0, 0)),  # params
        ],
        out_specs=pl.BlockSpec((T, C), lambda b: (b, 0)),
        compiler_params=pltpu.CompilerParams(
            dimension_semantics=("parallel",)),
    )(x2d, slab)
    return out.reshape(B, T, C)


# ---------------- pure-JAX f32 reference (for correctness check) -------------
def reference_block(x, params):
    (ln1g, ln1b, wq, wk, wv, wo, bo, ln2g, ln2b, wfc, bfc, wproj, bproj) = params

    def ln(z, g, b_):
        m = jnp.mean(z, -1, keepdims=True)
        v = jnp.mean((z - m) ** 2, -1, keepdims=True)
        return (z - m) / jnp.sqrt(v + LN_EPS) * g + b_

    xn1 = ln(x, ln1g, ln1b)
    q = xn1 @ wq
    k = xn1 @ wk
    v = xn1 @ wv
    qh = q.reshape(B, T, H, HS)
    kh = k.reshape(B, T, H, HS)
    vh = v.reshape(B, T, H, HS)
    s = jnp.einsum('bthd,bshd->bhts', qh, kh) * (HS ** -0.5)
    mask = jnp.tril(jnp.ones((T, T), bool))
    s = jnp.where(mask[None, None], s, -jnp.inf)
    w = jax.nn.softmax(s, axis=-1)
    att = jnp.einsum('bhts,bshd->bthd', w, vh).reshape(B, T, C)
    x1 = x + (att @ wo + bo)

    xn2 = ln(x1, ln2g, ln2b)
    h = xn2 @ wfc + bfc
    c = 0.7978845608028654
    h = 0.5 * h * (1.0 + jnp.tanh(c * (h + 0.044715 * h ** 3)))
    return x1 + (h @ wproj + bproj)


# ---------------- deterministic parameter init -------------------------------
def make_params(key):
    ks = jax.random.split(key, 8)
    std = 0.02
    ln1g = jnp.ones((1, C), jnp.float32) + 0.1 * jax.random.normal(ks[7], (1, C))
    ln1b = 0.05 * jax.random.normal(ks[4], (1, C), jnp.float32)
    ln2g = jnp.ones((1, C), jnp.float32)
    ln2b = jnp.zeros((1, C), jnp.float32)
    wq = jax.random.normal(ks[0], (C, C), jnp.float32) * std
    wk = jax.random.normal(ks[1], (C, C), jnp.float32) * std
    wv = jax.random.normal(ks[2], (C, C), jnp.float32) * std
    wo = jax.random.normal(ks[3], (C, C), jnp.float32) * std
    bo = jax.random.normal(ks[4], (1, C), jnp.float32) * std
    wfc = jax.random.normal(ks[5], (C, FF), jnp.float32) * std
    bfc = jnp.zeros((1, FF), jnp.float32)
    wproj = jax.random.normal(ks[6], (FF, C), jnp.float32) * std
    bproj = jax.random.normal(ks[7], (1, C), jnp.float32) * std
    return (ln1g, ln1b, wq, wk, wv, wo, bo, ln2g, ln2b, wfc, bfc, wproj, bproj)


if __name__ == "__main__":
    key = jax.random.PRNGKey(0)
    kx, kp = jax.random.split(key)
    x = jax.random.normal(kx, (B, T, C), jnp.float32)
    params = make_params(kp)

    # one-time, load-time packing (outside the per-call jitted path)
    slab = jax.block_until_ready(pack_params(params))

    out = gpt2_block(x, slab)
    out = jax.block_until_ready(out)

    ref = reference_block(x, params)
    assert out.shape == (B, T, C)
    # f32 matmuls throughout; residual error comes from the approximate (EUP)
    # softmax reciprocal and rsqrt, well within this tolerance.
    assert jnp.allclose(out, ref, atol=1e-2, rtol=1e-2), "mismatch vs JAX reference"

    print("KERNEL_OK")
</pallas_src>

<mosaic_0001>
module attributes {stable_mosaic.version = 11 : i64} {
  func.func @block_kernel(%arg0: i32, %arg1: memref<8x32xf32, #tpu.memory_space<vmem>>, %arg2: memref<232x128xf32, #tpu.memory_space<vmem>>, %arg3: memref<8x32xf32, #tpu.memory_space<vmem>>) attributes {dimension_semantics = [#tpu.dimension_semantics<parallel>], iteration_bounds = array<i64: 2>, scalar_prefetch = 0 : i64, scratch_operands = 0 : i64, tpu.core_type = #tpu.core_type<tc>, window_params = [{transform_indices = @transform_0, window_bounds = array<i64: 8, 32>}, {pipeline_mode = #tpu.pipeline_mode<synchronous>, transform_indices = @transform_1, window_bounds = array<i64: 232, 128>}, {transform_indices = @transform_2, window_bounds = array<i64: 8, 32>}]} {
    %c0 = arith.constant 0 : index
    %c0_0 = arith.constant 0 : index
    %0 = vector.load %arg1[%c0, %c0_0] : memref<8x32xf32, #tpu.memory_space<vmem>>, vector<8x32xf32>
    %c0_1 = arith.constant 0 : index
    %c0_2 = arith.constant 0 : index
    %1 = vector.load %arg2[%c0_1, %c0_2] : memref<232x128xf32, #tpu.memory_space<vmem>>, vector<32x96xf32>
    %c32 = arith.constant 32 : index
    %c0_3 = arith.constant 0 : index
    %2 = vector.load %arg2[%c32, %c0_3] : memref<232x128xf32, #tpu.memory_space<vmem>>, vector<32x32xf32>
    %c64 = arith.constant 64 : index
    %c0_4 = arith.constant 0 : index
    %3 = vector.load %arg2[%c64, %c0_4] : memref<232x128xf32, #tpu.memory_space<vmem>>, vector<32x128xf32>
    %c96 = arith.constant 96 : index
    %c0_5 = arith.constant 0 : index
    %4 = vector.load %arg2[%c96, %c0_5] : memref<232x128xf32, #tpu.memory_space<vmem>>, vector<128x32xf32>
    %c224 = arith.constant 224 : index
    %c0_6 = arith.constant 0 : index
    %5 = vector.load %arg2[%c224, %c0_6] : memref<232x128xf32, #tpu.memory_space<vmem>>, vector<1x96xf32>
    %c225 = arith.constant 225 : index
    %c0_7 = arith.constant 0 : index
    %6 = vector.load %arg2[%c225, %c0_7] : memref<232x128xf32, #tpu.memory_space<vmem>>, vector<1x32xf32>
    %c226 = arith.constant 226 : index
    %c0_8 = arith.constant 0 : index
    %7 = vector.load %arg2[%c226, %c0_8] : memref<232x128xf32, #tpu.memory_space<vmem>>, vector<1x128xf32>
    %c227 = arith.constant 227 : index
    %c0_9 = arith.constant 0 : index
    %8 = vector.load %arg2[%c227, %c0_9] : memref<232x128xf32, #tpu.memory_space<vmem>>, vector<1x32xf32>
    %cst = arith.constant dense<0.000000e+00> : vector<8xf32>
    %9 = vector.multi_reduction <add>, %0, %cst [1] : vector<8x32xf32> to vector<8xf32>
    %10 = vector.shape_cast %9 : vector<8xf32> to vector<8x1xf32>
    %cst_10 = arith.constant 3.200000e+01 : f32
    %11 = vector.broadcast %cst_10 : f32 to vector<8x1xf32>
    %12 = arith.divf %10, %11 : vector<8x1xf32>
    %13 = vector.broadcast %12 : vector<8x1xf32> to vector<8x32xf32>
    %14 = arith.subf %0, %13 : vector<8x32xf32>
    %15 = arith.mulf %14, %14 : vector<8x32xf32>
    %cst_11 = arith.constant dense<0.000000e+00> : vector<8xf32>
    %16 = vector.multi_reduction <add>, %15, %cst_11 [1] : vector<8x32xf32> to vector<8xf32>
    %17 = vector.shape_cast %16 : vector<8xf32> to vector<8x1xf32>
    %cst_12 = arith.constant 3.200000e+01 : f32
    %18 = vector.broadcast %cst_12 : f32 to vector<8x1xf32>
    %19 = arith.divf %17, %18 : vector<8x1xf32>
    %cst_13 = arith.constant 9.99999974E-6 : f32
    %20 = vector.broadcast %cst_13 : f32 to vector<8x1xf32>
    %21 = arith.addf %19, %20 : vector<8x1xf32>
    %22 = math.rsqrt %21 : vector<8x1xf32>
    %23 = vector.broadcast %22 : vector<8x1xf32> to vector<8x32xf32>
    %24 = arith.mulf %14, %23 : vector<8x32xf32>
    %cst_14 = arith.constant dense<0.000000e+00> : vector<8x96xf32>
    %25 = tpu.matmul %24, %1, %cst_14 {dimension_numbers = #tpu.dot_dimension_numbers<[1], [0], [0], [1], [0, 0, 1, 1], [], []>} : vector<8x32xf32>, vector<32x96xf32>, vector<8x96xf32> -> vector<8x96xf32>
    %26 = vector.broadcast %5 : vector<1x96xf32> to vector<8x96xf32>
    %27 = arith.addf %25, %26 : vector<8x96xf32>
    %28 = vector.extract_strided_slice %27 {offsets = [0, 0], sizes = [8, 32], strides = [1, 1]} : vector<8x96xf32> to vector<8x32xf32>
    %29 = vector.extract_strided_slice %27 {offsets = [0, 32], sizes = [8, 32], strides = [1, 1]} : vector<8x96xf32> to vector<8x32xf32>
    %30 = vector.extract_strided_slice %27 {offsets = [0, 64], sizes = [8, 32], strides = [1, 1]} : vector<8x96xf32> to vector<8x32xf32>
    %31 = tpu.iota {dimensions = array<i32: 0>} : vector<8x8xi32>
    %32 = tpu.iota {dimensions = array<i32: 1>} : vector<8x8xi32>
    %33 = arith.cmpi sge, %31, %32 : vector<8x8xi32>
    %34 = vector.extract_strided_slice %28 {offsets = [0, 0], sizes = [8, 8], strides = [1, 1]} : vector<8x32xf32> to vector<8x8xf32>
    %35 = vector.extract_strided_slice %29 {offsets = [0, 0], sizes = [8, 8], strides = [1, 1]} : vector<8x32xf32> to vector<8x8xf32>
    %cst_15 = arith.constant dense<0.000000e+00> : vector<8x8xf32>
    %36 = tpu.matmul %34, %35, %cst_15 {dimension_numbers = #tpu.dot_dimension_numbers<[1], [1], [0], [0], [0, 0, 1, 0], [], []>} : vector<8x8xf32>, vector<8x8xf32>, vector<8x8xf32> -> vector<8x8xf32>
    %cst_16 = arith.constant -1.000000e+30 : f32
    %37 = vector.broadcast %cst_16 : f32 to vector<8x8xf32>
    %38 = arith.select %33, %36, %37 : vector<8x8xi1>, vector<8x8xf32>
    %39 = vector.extract_strided_slice %28 {offsets = [0, 8], sizes = [8, 8], strides = [1, 1]} : vector<8x32xf32> to vector<8x8xf32>
    %40 = vector.extract_strided_slice %29 {offsets = [0, 8], sizes = [8, 8], strides = [1, 1]} : vector<8x32xf32> to vector<8x8xf32>
    %cst_17 = arith.constant dense<0.000000e+00> : vector<8x8xf32>
    %41 = tpu.matmul %39, %40, %cst_17 {dimension_numbers = #tpu.dot_dimension_numbers<[1], [1], [0], [0], [0, 0, 1, 0], [], []>} : vector<8x8xf32>, vector<8x8xf32>, vector<8x8xf32> -> vector<8x8xf32>
    %cst_18 = arith.constant -1.000000e+30 : f32
    %42 = vector.broadcast %cst_18 : f32 to vector<8x8xf32>
    %43 = arith.select %33, %41, %42 : vector<8x8xi1>, vector<8x8xf32>
    %44 = vector.extract_strided_slice %28 {offsets = [0, 16], sizes = [8, 8], strides = [1, 1]} : vector<8x32xf32> to vector<8x8xf32>
    %45 = vector.extract_strided_slice %29 {offsets = [0, 16], sizes = [8, 8], strides = [1, 1]} : vector<8x32xf32> to vector<8x8xf32>
    %cst_19 = arith.constant dense<0.000000e+00> : vector<8x8xf32>
    %46 = tpu.matmul %44, %45, %cst_19 {dimension_numbers = #tpu.dot_dimension_numbers<[1], [1], [0], [0], [0, 0, 1, 0], [], []>} : vector<8x8xf32>, vector<8x8xf32>, vector<8x8xf32> -> vector<8x8xf32>
    %cst_20 = arith.constant -1.000000e+30 : f32
    %47 = vector.broadcast %cst_20 : f32 to vector<8x8xf32>
    %48 = arith.select %33, %46, %47 : vector<8x8xi1>, vector<8x8xf32>
    %49 = vector.extract_strided_slice %28 {offsets = [0, 24], sizes = [8, 8], strides = [1, 1]} : vector<8x32xf32> to vector<8x8xf32>
    %50 = vector.extract_strided_slice %29 {offsets = [0, 24], sizes = [8, 8], strides = [1, 1]} : vector<8x32xf32> to vector<8x8xf32>
    %cst_21 = arith.constant dense<0.000000e+00> : vector<8x8xf32>
    %51 = tpu.matmul %49, %50, %cst_21 {dimension_numbers = #tpu.dot_dimension_numbers<[1], [1], [0], [0], [0, 0, 1, 0], [], []>} : vector<8x8xf32>, vector<8x8xf32>, vector<8x8xf32> -> vector<8x8xf32>
    %cst_22 = arith.constant -1.000000e+30 : f32
    %52 = vector.broadcast %cst_22 : f32 to vector<8x8xf32>
    %53 = arith.select %33, %51, %52 : vector<8x8xi1>, vector<8x8xf32>
    %54 = tpu.concatenate %38, %43, %48, %53 in 0 : vector<8x8xf32>, vector<8x8xf32>, vector<8x8xf32>, vector<8x8xf32> -> vector<32x8xf32>
    %cst_23 = arith.constant dense<0xFF800000> : vector<32xf32>
    %55 = vector.multi_reduction <maximumf>, %54, %cst_23 [1] : vector<32x8xf32> to vector<32xf32>
    %56 = vector.shape_cast %55 : vector<32xf32> to vector<32x1xf32>
    %57 = vector.broadcast %56 : vector<32x1xf32> to vector<32x8xf32>
    %58 = arith.subf %54, %57 : vector<32x8xf32>
    %59 = math.exp %58 : vector<32x8xf32>
    %cst_24 = arith.constant dense<0.000000e+00> : vector<32xf32>
    %60 = vector.multi_reduction <add>, %59, %cst_24 [1] : vector<32x8xf32> to vector<32xf32>
    %61 = vector.shape_cast %60 : vector<32xf32> to vector<32x1xf32>
    %62 = tpu.reciprocal %61 {approx = true} : vector<32x1xf32> -> vector<32x1xf32>
    %63 = vector.broadcast %62 : vector<32x1xf32> to vector<32x8xf32>
    %64 = arith.mulf %59, %63 : vector<32x8xf32>
    %65 = vector.extract_strided_slice %64 {offsets = [0, 0], sizes = [8, 8], strides = [1, 1]} : vector<32x8xf32> to vector<8x8xf32>
    %66 = vector.extract_strided_slice %30 {offsets = [0, 0], sizes = [8, 8], strides = [1, 1]} : vector<8x32xf32> to vector<8x8xf32>
    %cst_25 = arith.constant dense<0.000000e+00> : vector<8x8xf32>
    %67 = tpu.matmul %65, %66, %cst_25 {dimension_numbers = #tpu.dot_dimension_numbers<[1], [0], [0], [1], [0, 0, 1, 1], [], []>} : vector<8x8xf32>, vector<8x8xf32>, vector<8x8xf32> -> vector<8x8xf32>
    %68 = vector.extract_strided_slice %2 {offsets = [0, 0], sizes = [8, 32], strides = [1, 1]} : vector<32x32xf32> to vector<8x32xf32>
    %cst_26 = arith.constant dense<0.000000e+00> : vector<8x32xf32>
    %69 = tpu.matmul %67, %68, %cst_26 {dimension_numbers = #tpu.dot_dimension_numbers<[1], [0], [0], [1], [0, 0, 1, 1], [], []>} : vector<8x8xf32>, vector<8x32xf32>, vector<8x32xf32> -> vector<8x32xf32>
    %70 = vector.extract_strided_slice %64 {offsets = [8, 0], sizes = [8, 8], strides = [1, 1]} : vector<32x8xf32> to vector<8x8xf32>
    %71 = vector.extract_strided_slice %30 {offsets = [0, 8], sizes = [8, 8], strides = [1, 1]} : vector<8x32xf32> to vector<8x8xf32>
    %cst_27 = arith.constant dense<0.000000e+00> : vector<8x8xf32>
    %72 = tpu.matmul %70, %71, %cst_27 {dimension_numbers = #tpu.dot_dimension_numbers<[1], [0], [0], [1], [0, 0, 1, 1], [], []>} : vector<8x8xf32>, vector<8x8xf32>, vector<8x8xf32> -> vector<8x8xf32>
    %73 = vector.extract_strided_slice %2 {offsets = [8, 0], sizes = [8, 32], strides = [1, 1]} : vector<32x32xf32> to vector<8x32xf32>
    %cst_28 = arith.constant dense<0.000000e+00> : vector<8x32xf32>
    %74 = tpu.matmul %72, %73, %cst_28 {dimension_numbers = #tpu.dot_dimension_numbers<[1], [0], [0], [1], [0, 0, 1, 1], [], []>} : vector<8x8xf32>, vector<8x32xf32>, vector<8x32xf32> -> vector<8x32xf32>
    %75 = arith.addf %69, %74 : vector<8x32xf32>
    %76 = vector.extract_strided_slice %64 {offsets = [16, 0], sizes = [8, 8], strides = [1, 1]} : vector<32x8xf32> to vector<8x8xf32>
    %77 = vector.extract_strided_slice %30 {offsets = [0, 16], sizes = [8, 8], strides = [1, 1]} : vector<8x32xf32> to vector<8x8xf32>
    %cst_29 = arith.constant dense<0.000000e+00> : vector<8x8xf32>
    %78 = tpu.matmul %76, %77, %cst_29 {dimension_numbers = #tpu.dot_dimension_numbers<[1], [0], [0], [1], [0, 0, 1, 1], [], []>} : vector<8x8xf32>, vector<8x8xf32>, vector<8x8xf32> -> vector<8x8xf32>
    %79 = vector.extract_strided_slice %2 {offsets = [16, 0], sizes = [8, 32], strides = [1, 1]} : vector<32x32xf32> to vector<8x32xf32>
    %cst_30 = arith.constant dense<0.000000e+00> : vector<8x32xf32>
    %80 = tpu.matmul %78, %79, %cst_30 {dimension_numbers = #tpu.dot_dimension_numbers<[1], [0], [0], [1], [0, 0, 1, 1], [], []>} : vector<8x8xf32>, vector<8x32xf32>, vector<8x32xf32> -> vector<8x32xf32>
    %81 = arith.addf %75, %80 : vector<8x32xf32>
    %82 = vector.extract_strided_slice %64 {offsets = [24, 0], sizes = [8, 8], strides = [1, 1]} : vector<32x8xf32> to vector<8x8xf32>
    %83 = vector.extract_strided_slice %30 {offsets = [0, 24], sizes = [8, 8], strides = [1, 1]} : vector<8x32xf32> to vector<8x8xf32>
    %cst_31 = arith.constant dense<0.000000e+00> : vector<8x8xf32>
    %84 = tpu.matmul %82, %83, %cst_31 {dimension_numbers = #tpu.dot_dimension_numbers<[1], [0], [0], [1], [0, 0, 1, 1], [], []>} : vector<8x8xf32>, vector<8x8xf32>, vector<8x8xf32> -> vector<8x8xf32>
    %85 = vector.extract_strided_slice %2 {offsets = [24, 0], sizes = [8, 32], strides = [1, 1]} : vector<32x32xf32> to vector<8x32xf32>
    %cst_32 = arith.constant dense<0.000000e+00> : vector<8x32xf32>
    %86 = tpu.matmul %84, %85, %cst_32 {dimension_numbers = #tpu.dot_dimension_numbers<[1], [0], [0], [1], [0, 0, 1, 1], [], []>} : vector<8x8xf32>, vector<8x32xf32>, vector<8x32xf32> -> vector<8x32xf32>
    %87 = arith.addf %81, %86 : vector<8x32xf32>
    %88 = arith.addf %0, %87 : vector<8x32xf32>
    %89 = vector.broadcast %6 : vector<1x32xf32> to vector<8x32xf32>
    %90 = arith.addf %88, %89 : vector<8x32xf32>
    %cst_33 = arith.constant dense<0.000000e+00> : vector<8xf32>
    %91 = vector.multi_reduction <add>, %90, %cst_33 [1] : vector<8x32xf32> to vector<8xf32>
    %92 = vector.shape_cast %91 : vector<8xf32> to vector<8x1xf32>
    %cst_34 = arith.constant 3.200000e+01 : f32
    %93 = vector.broadcast %cst_34 : f32 to vector<8x1xf32>
    %94 = arith.divf %92, %93 : vector<8x1xf32>
    %95 = vector.broadcast %94 : vector<8x1xf32> to vector<8x32xf32>
    %96 = arith.subf %90, %95 : vector<8x32xf32>
    %97 = arith.mulf %96, %96 : vector<8x32xf32>
    %cst_35 = arith.constant dense<0.000000e+00> : vector<8xf32>
    %98 = vector.multi_reduction <add>, %97, %cst_35 [1] : vector<8x32xf32> to vector<8xf32>
    %99 = vector.shape_cast %98 : vector<8xf32> to vector<8x1xf32>
    %cst_36 = arith.constant 3.200000e+01 : f32
    %100 = vector.broadcast %cst_36 : f32 to vector<8x1xf32>
    %101 = arith.divf %99, %100 : vector<8x1xf32>
    %cst_37 = arith.constant 9.99999974E-6 : f32
    %102 = vector.broadcast %cst_37 : f32 to vector<8x1xf32>
    %103 = arith.addf %101, %102 : vector<8x1xf32>
    %104 = math.rsqrt %103 : vector<8x1xf32>
    %105 = vector.broadcast %104 : vector<8x1xf32> to vector<8x32xf32>
    %106 = arith.mulf %96, %105 : vector<8x32xf32>
    %cst_38 = arith.constant dense<0.000000e+00> : vector<8x128xf32>
    %107 = tpu.matmul %106, %3, %cst_38 {dimension_numbers = #tpu.dot_dimension_numbers<[1], [0], [0], [1], [0, 0, 1, 1], [], []>} : vector<8x32xf32>, vector<32x128xf32>, vector<8x128xf32> -> vector<8x128xf32>
    %108 = vector.broadcast %7 : vector<1x128xf32> to vector<8x128xf32>
    %109 = arith.addf %107, %108 : vector<8x128xf32>
    %cst_39 = arith.constant 5.000000e-01 : f32
    %110 = vector.broadcast %cst_39 : f32 to vector<8x128xf32>
    %111 = arith.mulf %110, %109 : vector<8x128xf32>
    %cst_40 = arith.constant 4.471500e-02 : f32
    %112 = vector.broadcast %cst_40 : f32 to vector<8x128xf32>
    %113 = arith.mulf %112, %109 : vector<8x128xf32>
    %114 = arith.mulf %113, %109 : vector<8x128xf32>
    %115 = arith.mulf %114, %109 : vector<8x128xf32>
    %116 = arith.addf %109, %115 : vector<8x128xf32>
    %cst_41 = arith.constant 0.797884583 : f32
    %117 = vector.broadcast %cst_41 : f32 to vector<8x128xf32>
    %118 = arith.mulf %117, %116 : vector<8x128xf32>
    %119 = math.tanh %118 : vector<8x128xf32>
    %cst_42 = arith.constant 1.000000e+00 : f32
    %120 = vector.broadcast %cst_42 : f32 to vector<8x128xf32>
    %121 = arith.addf %120, %119 : vector<8x128xf32>
    %122 = arith.mulf %111, %121 : vector<8x128xf32>
    %cst_43 = arith.constant dense<0.000000e+00> : vector<8x32xf32>
    %123 = tpu.matmul %122, %4, %cst_43 {dimension_numbers = #tpu.dot_dimension_numbers<[1], [0], [0], [1], [0, 0, 1, 1], [], []>} : vector<8x128xf32>, vector<128x32xf32>, vector<8x32xf32> -> vector<8x32xf32>
    %124 = vector.broadcast %8 : vector<1x32xf32> to vector<8x32xf32>
    %125 = arith.addf %123, %124 : vector<8x32xf32>
    %126 = arith.addf %90, %125 : vector<8x32xf32>
    %c0_44 = arith.constant 0 : index
    %c0_45 = arith.constant 0 : index
    %127 = vector.load %arg3[%c0_44, %c0_45] : memref<8x32xf32, #tpu.memory_space<vmem>>, vector<8x32xf32>
    tpu.vector_store %arg3[%c0_44, %c0_45], %126 {strides = array<i32>} : memref<8x32xf32, #tpu.memory_space<vmem>>, vector<8x32xf32>,
    return
  }
  func.func @transform_0(%arg0: i32) -> (i32, i32) {
    %c0_i32 = arith.constant 0 : i32
    %c0_i32_0 = arith.constant 0 : i32
    return %arg0, %c0_i32 : i32, i32
  }
  func.func @transform_1(%arg0: i32) -> (i32, i32) {
    %c0_i32 = arith.constant 0 : i32
    %c0_i32_0 = arith.constant 0 : i32
    %c0_i32_1 = arith.constant 0 : i32
    return %c0_i32, %c0_i32_0 : i32, i32
  }
  func.func @transform_2(%arg0: i32) -> (i32, i32) {
    %c0_i32 = arith.constant 0 : i32
    %c0_i32_0 = arith.constant 0 : i32
    return %arg0, %c0_i32 : i32, i32
  }
}

</mosaic_0001>

<llo_original>
// kernel: gpt2_block.1
$region0: #{gpt2_block.1}
  #allocation0 [shape = 'u32[]', space=smem, size = 0x4, offset = 0x4, fixed_abs, tag = 'smem constant byte address 0x4 - core index']
  #allocation1 [shape = 'u32[144,128]{1,0:T(1,128)}', space=vmem, size = 0x12000, scoped, tag = 'internal scratch']
  %s0 = inlined_call_operand.hbm [shape: f32[16,32], index: 0, kind: input, shape index: {}]
  %s1 = inlined_call_operand.hbm [shape: f32[232,128], index: 1, kind: input, shape index: {}]
  %s2 = inlined_call_operand.hbm [shape: f32[16,32], index: 2, kind: output, shape index: {}]
  %s3 = sld [smem:[#allocation0]]
  $region49: #{gpt2_block.1} parent=0
    _
  %s5 = ssub.s32 1, %s3
  %s6 = scalar_select 0, %s5, %s3
  $region1: #{gpt2_block.1} parent=0
    #allocation2 [shape = 'u8[8192]{0}', space=vmem, size = 0x2000, scoped, tag = 'input window, operand 0']
    #allocation3 [shape = 's32[2]{0}', space=sflag, size = 0x8, scoped, tag = 'scoped memory for gpt2_block.1']
    #allocation4 [shape = 's32[2]{0}', space=sflag, size = 0x8, scoped, tag = 'scoped memory for gpt2_block.1']
    #allocation5 [shape = 'u8[118784]{0}', space=vmem, size = 0x1d000, scoped, tag = 'input window, operand 1, single buffered']
    #allocation6 [shape = 's32[1]{0}', space=sflag, size = 0x4, scoped, tag = 'scoped memory for gpt2_block.1']
    #allocation7 [shape = 'u8[8192]{0}', space=vmem, size = 0x2000, scoped, tag = 'output window, operand 0']
    %7 = vsyncpa [#allocation3], 0
    %s8 = scalar_lea.sflag [#allocation3], 1
    %9 = vsyncpa %s8, 0
    %10 = vsyncpa [#allocation6], 0
    %11 = vsyncpa [#allocation4], 0
    %s12 = scalar_lea.sflag [#allocation4], 1
    %13 = vsyncpa %s12, 0
    loop: start=0, step=1, limit=4
    $region2: #{gpt2_block.1} parent=1 // loop_pre_header
      _
    $region3: #{gpt2_block.1} parent=1 // loop_header
      %s15 = sphi 0, %s19
      %p16 = scmp.ge.s32.totalorder %s15, 4
      %s25 = sphi 0, %s27
      %s28 = sphi 0, %s25
      %s29 = sphi 0, %s28
      %s45 = sphi 0, %s29
      %s49 = sphi 0, %s49
      %s51 = sphi 0, %s49
      %s52 = sphi 0, %s51
      %s66 = sphi 0, %s52
      %s72 = sphi 0, %s74
      %s75 = sphi 0, %s72
      %s76 = sphi 0, %s75
      %s92 = sphi 0, %s76
    $region4: #{gpt2_block.1} parent=1 // loop_header_branch
      %18 = sbr.rel (%p16) target = $region8
    $region5: #{gpt2_block.1} parent=1 // loop_body
      %s20 = ssub.s32 %s15, 1
      %s21 = ssub.s32 %s15, 2
      %s22 = sadd.s32 %s15, 1
      %s23 = ssub.s32 %s15, %s22
      %p24 = scmp.eq.s32.totalorder %s23, 0
      %s26 = sadd.s32 %s25, 1
      %s27 = scalar_select %p24, %s25, %s26
      %p30 = pneg %p24
      %p31 = scmp.eq.s32.totalorder %s15, 1
      %p32 = por %p30, %p31
      %p33 = scmp.ne.s32.totalorder %s25, %s28
      %p34 = scmp.eq.s32.totalorder %s15, 0
      %p35 = por %p33, %p34
      %p36 = scmp.ne.s32.totalorder %s25, %s28
      %p37 = scmp.eq.s32.totalorder %s20, 1
      %p38 = por %p36, %p37
      %p39 = scmp.ne.s32.totalorder %s28, %s29
      %p40 = scmp.eq.s32.totalorder %s20, 0
      %p41 = por %p39, %p40
      %p42 = scmp.ne.s32.totalorder %s28, %s29
      %p43 = scmp.eq.s32.totalorder %s21, 1
      %p44 = por %p42, %p43
      %p46 = scmp.ne.s32.totalorder %s29, %s45
      %p47 = scmp.eq.s32.totalorder %s21, 0
      %p48 = por %p46, %p47
      %s50 = sadd.s32 %s49, 1
      %p53 = scmp.eq.s32.totalorder %s15, 1
      %p54 = scmp.ne.s32.totalorder %s49, %s51
      %p55 = scmp.eq.s32.totalorder %s15, 0
      %p56 = por %p54, %p55
      %p57 = scmp.ne.s32.totalorder %s49, %s51
      %p58 = scmp.eq.s32.totalorder %s20, 1
      %p59 = por %p57, %p58
      %p60 = scmp.ne.s32.totalorder %s51, %s52
      %p61 = scmp.eq.s32.totalorder %s20, 0
      %p62 = por %p60, %p61
      %p63 = scmp.ne.s32.totalorder %s51, %s52
      %p64 = scmp.eq.s32.totalorder %s21, 1
      %p65 = por %p63, %p64
      %p67 = scmp.ne.s32.totalorder %s52, %s66
      %p68 = scmp.eq.s32.totalorder %s21, 0
      %p69 = por %p67, %p68
      %s70 = ssub.s32 %s15, %s22
      %p71 = scmp.eq.s32.totalorder %s70, 0
      %s73 = sadd.s32 %s72, 1
      %s74 = scalar_select %p71, %s72, %s73
      %p77 = pneg %p71
      %p78 = scmp.eq.s32.totalorder %s15, 1
      %p79 = por %p77, %p78
      %p80 = scmp.ne.s32.totalorder %s72, %s75
      %p81 = scmp.eq.s32.totalorder %s15, 0
      %p82 = por %p80, %p81
      %p83 = scmp.ne.s32.totalorder %s72, %s75
      %p84 = scmp.eq.s32.totalorder %s20, 1
      %p85 = por %p83, %p84
      %p86 = scmp.ne.s32.totalorder %s75, %s76
      %p87 = scmp.eq.s32.totalorder %s20, 0
      %p88 = por %p86, %p87
      %p89 = scmp.ne.s32.totalorder %s75, %s76
      %p90 = scmp.eq.s32.totalorder %s21, 1
      %p91 = por %p89, %p90
      %p93 = scmp.ne.s32.totalorder %s76, %s92
      %p94 = scmp.eq.s32.totalorder %s21, 0
      %p95 = por %p93, %p94
      %p96 = scmp.le.s32.totalorder 1, %s15
      %p97 = scmp.lt.s32.totalorder %s15, 3
      %p98 = pnand %p96, %p97
      %p99 = pneg %p98
      // Predicated region
      $region9: #{gpt2_block.1} parent=5 // pred_check
        _
      $region10: #{gpt2_block.1} parent=5 // pred_check_branch
        %101 = sbr.rel (%p98) target = $region12
      $region11: #{gpt2_block.1} parent=5 // pred_region
        %s102 = ssub.s32 %s15, 1
        // Predicated region
        $region13: #{gpt2_block.1} parent=11 // pred_check
          %p103 = pneg %p62
        $region14: #{gpt2_block.1} parent=11 // pred_check_branch
          %105 = sbr.rel (%p103) target = $region16
        $region15: #{gpt2_block.1} parent=11 // pred_region
          %s107 = ssub.s32 3712, 3712
          %108 = vsyncadd [#allocation6], %s107
          %s109 = sshll.u32 [#allocation5], 4
          %s110 = int_to_ptr.vmem [resolvable:$true] %s109
          %115 = dma.hbm_to_vmem [thread:$0]  %s1, 3712, %s110, [#allocation6], 128, 128, 8
        $region16: #{gpt2_block.1} parent=11 // pred_fallthru
          _
      $region12: #{gpt2_block.1} parent=5 // pred_fallthru
        _
      %p116 = scmp.lt.s32.totalorder %s15, 2
      // Predicated region
      $region17: #{gpt2_block.1} parent=5 // pred_check
        %p117 = pneg %p116
      $region18: #{gpt2_block.1} parent=5 // pred_check_branch
        %119 = sbr.rel (%p117) target = $region20
      $region19: #{gpt2_block.1} parent=5 // pred_region
        // Predicated region
        $region21: #{gpt2_block.1} parent=19 // pred_check
          %p120 = pneg %p35
        $region22: #{gpt2_block.1} parent=19 // pred_check_branch
          %122 = sbr.rel (%p120) target = $region24
        $region23: #{gpt2_block.1} parent=19 // pred_region
          %s123 = sand.u32 %s25, 1
          %s124 = scalar_lea.sflag [#allocation3], %s123
          %s125 = sand.u32 %s25, 1
          %s126 = smul.addr %s125, 8
          %s127 = scalar_lea.vmem [#allocation2], %s126
          %s129 = ssub.s32 128, 128
          %130 = vsyncadd %s124, %s129
          %s131 = smul.addr %s15, 128
          %s132 = scalar_lea.hbm %s0, %s131
          %s134 = sshll.u32 %s127, 4
          %s135 = int_to_ptr.vmem [resolvable:$true] %s134
          %137 = dma.hbm_to_vmem [thread:$0]  %s132, 128, %s135, %s124
        $region24: #{gpt2_block.1} parent=19 // pred_fallthru
          _
      $region20: #{gpt2_block.1} parent=5 // pred_fallthru
        _
      %p138 = scmp.le.s32.totalorder 1, %s15
      %p139 = scmp.lt.s32.totalorder %s15, 3
      %p140 = pnand %p138, %p139
      %p141 = pneg %p140
      // Predicated region
      $region25: #{gpt2_block.1} parent=5 // pred_check
        _
      $region26: #{gpt2_block.1} parent=5 // pred_check_branch
        %143 = sbr.rel (%p140) target = $region28
      $region27: #{gpt2_block.1} parent=5 // pred_region
        %s144 = ssub.s32 %s15, 1
        %s145 = sand.u32 %s28, 1
        %s146 = scalar_lea.sflag [#allocation3], %s145
        %s147 = sand.u32 %s28, 1
        %s148 = smul.addr %s147, 8
        %s149 = scalar_lea.vmem [#allocation2], %s148
        // Predicated region
        $region29: #{gpt2_block.1} parent=27 // pred_check
          %p150 = pneg %p41
        $region30: #{gpt2_block.1} parent=27 // pred_check_branch
          %152 = sbr.rel (%p150) target = $region32
        $region31: #{gpt2_block.1} parent=27 // pred_region
          %153 = dma.done %s146, 128
        $region32: #{gpt2_block.1} parent=27 // pred_fallthru
          _
        // Predicated region
        $region33: #{gpt2_block.1} parent=27 // pred_check
          %p154 = pneg %p62
        $region34: #{gpt2_block.1} parent=27 // pred_check_branch
          %156 = sbr.rel (%p154) target = $region36
        $region35: #{gpt2_block.1} parent=27 // pred_region
          %157 = dma.done [#allocation6], 3712
        $region36: #{gpt2_block.1} parent=27 // pred_fallthru
          _
        %s158 = sand.u32 %s28, 1
        %s159 = scalar_lea.sflag [#allocation3], %s158
        %s160 = sand.u32 %s28, 1
        %s161 = smul.addr %s160, 8
        %s162 = scalar_lea.vmem [#allocation2], %s161
        %p163 = pneg %p41
        %p164 = pneg %p38
        %p165 = pneg %p62
        %p166 = pneg %p59
        %p167 = pneg %p88
        %p168 = pneg %p85
        %s169 = sand.u32 %s75, 1
        %s170 = scalar_lea.sflag [#allocation4], %s169
        %s171 = sand.u32 %s75, 1
        %s172 = smul.addr %s171, 8
        %s173 = scalar_lea.vmem [#allocation7], %s172
        %v174 = vld [vmem:[%s149] sm:$0xff]
        %v175 = vld [vmem:[#allocation5] sm:$0xff]
        %v176 = vld [vmem:[#allocation5 + $0x8] sm:$0xff]
        %v177 = vld [vmem:[#allocation5 + $0x10] sm:$0xff]
        %v178 = vld [vmem:[#allocation5 + $0x18] sm:$0xff]
        %v179 = vld [vmem:[#allocation5 + $0x20] sm:$0xff]
        %v180 = vld [vmem:[#allocation5 + $0x28] sm:$0xff]
        %v181 = vld [vmem:[#allocation5 + $0x30] sm:$0xff]
        %v182 = vld [vmem:[#allocation5 + $0x38] sm:$0xff]
        %v183 = vld [vmem:[#allocation5 + $0x40] sm:$0xff]
        %v184 = vld [vmem:[#allocation5 + $0x48] sm:$0xff]
        %v185 = vld [vmem:[#allocation5 + $0x50] sm:$0xff]
        %v186 = vld [vmem:[#allocation5 + $0x58] sm:$0xff]
        %v187 = vld [vmem:[#allocation5 + $0x60] sm:$0xff]
        %v188 = vld [vmem:[#allocation5 + $0x68] sm:$0xff]
        %v189 = vld [vmem:[#allocation5 + $0x70] sm:$0xff]
        %v190 = vld [vmem:[#allocation5 + $0x78] sm:$0xff]
        %v191 = vld [vmem:[#allocation5 + $0x80] sm:$0xff]
        %v192 = vld [vmem:[#allocation5 + $0x88] sm:$0xff]
        %v193 = vld [vmem:[#allocation5 + $0x90] sm:$0xff]
        %v194 = vld [vmem:[#allocation5 + $0x98] sm:$0xff]
        %v195 = vld [vmem:[#allocation5 + $0xa0] sm:$0xff]
        %v196 = vld [vmem:[#allocation5 + $0xa8] sm:$0xff]
        %v197 = vld [vmem:[#allocation5 + $0xb0] sm:$0xff]
        %v198 = vld [vmem:[#allocation5 + $0xb8] sm:$0xff]
        %v199 = vld [vmem:[#allocation5 + $0xc0] sm:$0xff]
        %v200 = vld [vmem:[#allocation5 + $0xc8] sm:$0xff]
        %v201 = vld [vmem:[#allocation5 + $0xd0] sm:$0xff]
        %v202 = vld [vmem:[#allocation5 + $0xd8] sm:$0xff]
        %v203 = vld [vmem:[#allocation5 + $0xe0] sm:$0x1]
        %v204 = vld [vmem:[#allocation5 + $0xe1] sm:$0x1]
        %v205 = vld [vmem:[#allocation5 + $0xe2] sm:$0x1]
        %v206 = vld [vmem:[#allocation5 + $0xe3] sm:$0x1]
        %vm207 = vcmask 261120
        %v208 = vsel %vm207, %v174, 0.0
        %209 = vadd.xlane.f32.xlu0 %v208
        %v210 = vpop.xlane.xlu0 %209
        %v211 = vrcp.pop 32.0
        %v212 = vmul.f32 %v210, %v211
        %v213 = vsub.f32 %v174, %v212
        %v214 = vmul.f32 %v213, %v213
        %v215 = vsel %vm207, %v214, 0.0
        %216 = vadd.xlane.f32.xlu0 %v215
        %v217 = vpop.xlane.xlu0 %216
        %v218 = vmul.f32 %v217, %v211
        %v219 = vadd.f32 %v218, 1e-05
        %v220 = vrsqrt.pop %v219
        %v221 = vmul.f32 %v213, %v220
        %v222 = vlaneseq
        %v223 = vshrl.u32 %v222, 7
        %v224 = vsub.s32 0, %v223
        %v225 = vrot.slane %v203, %v224
        %v227 = vsel %vm207, %v221, 0
        %229 = vmatprep.subr.mxu0 0.0
        %230 = vmatpush1.msra.mxu0 %v175
        %231 = vmatprep.subr.mxu0 0.0
        %232 = vmatpush1.msra.mxu0 %v176
        %233 = vmatprep.subr.mxu0 0.0
        %234 = vmatpush1.msra.mxu0 %v177
        %235 = vmatprep.subr.mxu0 0.0
        %236 = vmatpush1.msra.mxu0 %v178
        %237 = vmatprep.subr.mxu0 0.0
        %238 = vmatpush1.msra.mxu0 0.0
        %239 = vmatprep.subr.mxu0 0.0
        %240 = vmatpush1.msra.mxu0 0.0
        %241 = vmatprep.subr.mxu0 0.0
        %242 = vmatpush1.msra.mxu0 0.0
        %243 = vmatprep.subr.mxu0 0.0
        %244 = vmatpush1.msra.mxu0 0.0
        %245 = vmatprep.subr.mxu0 0.0
        %246 = vmatpush1.msra.mxu0 0.0
        %247 = vmatprep.subr.mxu0 0.0
        %248 = vmatpush1.msra.mxu0 0.0
        %249 = vmatprep.subr.mxu0 0.0
        %250 = vmatpush1.msra.mxu0 0.0
        %251 = vmatprep.subr.mxu0 0.0
        %252 = vmatpush1.msra.mxu0 0.0
        %253 = vmatprep.subr.mxu0 0.0
        %254 = vmatpush1.msra.mxu0 0.0
        %255 = vmatprep.subr.mxu0 0.0
        %256 = vmatpush1.msra.mxu0 0.0
        %257 = vmatprep.subr.mxu0 0.0
        %258 = vmatpush1.msra.mxu0 0.0
        %259 = vmatprep.subr.mxu0 0.0
        %260 = vmatpush1.msra.mxu0 0.0
        %261 = vmatprep.subr.mxu0 0.0
        %262 = vmatpush1.msra.mxu0 0.0
        %263 = vmatprep.subr.mxu0 0.0
        %264 = vmatpush1.msra.mxu0 0.0
        %265 = vmatprep.subr.mxu0 0.0
        %266 = vmatpush1.msra.mxu0 0.0
        %267 = vmatprep.subr.mxu0 0.0
        %268 = vmatpush1.msra.mxu0 0.0
        %269 = vmatprep.subr.mxu0 0.0
        %270 = vmatpush1.msra.mxu0 0.0
        %271 = vmatprep.subr.mxu0 0.0
        %272 = vmatpush1.msra.mxu0 0.0
        %273 = vmatprep.subr.mxu0 0.0
        %274 = vmatpush1.msra.mxu0 0.0
        %275 = vmatprep.subr.mxu0 0.0
        %276 = vmatpush1.msra.mxu0 0.0
        %277 = vmatprep.subr.mxu0 0.0
        %278 = vmatpush1.msra.mxu0 0.0
        %279 = vmatprep.subr.mxu0 0.0
        %280 = vmatpush1.msra.mxu0 0.0
        %281 = vmatprep.subr.mxu0 0.0
        %282 = vmatpush1.msra.mxu0 0.0
        %283 = vmatprep.subr.mxu0 0.0
        %284 = vmatpush1.msra.mxu0 0.0
        %285 = vmatprep.subr.mxu0 0.0
        %286 = vmatpush1.msra.mxu0 0.0
        %287 = vmatprep.subr.mxu0 0.0
        %288 = vmatpush1.msra.mxu0 0.0
        %289 = vmatprep.subr.mxu0 0.0
        %290 = vmatpush1.msra.mxu0 0.0
        %291 = vmatprep.subr.mxu0 0.0
        %292 = vmatpush1.msra.mxu0 0.0
        %293 = vmatprep.mubr.f32.mxu0 0.0
        %294 = vmatmul.mubr.f32.gmra.mrb[0].mxu0 %v227
        %v295 = vpop.f32.mrb[0].mxu0
        %v296 = vadd.f32 %v225, %v295
        %v297 = vpop.f32.mrb[0].mxu0
        %298 = vdwg.mxu0
        %v299 = vlaneseq
        %v300 = vshrl.u32 %v299, 7
        %v301 = vlaneseq
        %v302 = vand.u32 %v301, 127
        %vm303 = vcmp.ge.s32.totalorder %v300, %v302
        %305 = vrot.lane.b32.xlu0 %v296, 96
        %v306 = vpop.permute.xlu0 %305
        %vm307 = vcmask 64512
        %v308 = vsel %vm307, %v296, 0
        %v310 = vsel %vm307, %v306, 0
        %312 = vmatprep.subr.mxu0 0.0
        %313 = vmatpush1.xpose.msra.mxu0 %v310
        %314 = vmatprep.subr.mxu0 0.0
        %315 = vmatpush1.xpose.msra.mxu0 0.0
        %316 = vmatprep.subr.mxu0 0.0
        %317 = vmatpush1.xpose.msra.mxu0 0.0
        %318 = vmatprep.subr.mxu0 0.0
        %319 = vmatpush1.xpose.msra.mxu0 0.0
        %320 = vmatprep.subr.mxu0 0.0
        %321 = vmatpush1.xpose.msra.mxu0 0.0
        %322 = vmatprep.subr.mxu0 0.0
        %323 = vmatpush1.xpose.msra.mxu0 0.0
        %324 = vmatprep.subr.mxu0 0.0
        %325 = vmatpush1.xpose.msra.mxu0 0.0
        %326 = vmatprep.subr.mxu0 0.0
        %327 = vmatpush1.xpose.msra.mxu0 0.0
        %328 = vmatprep.subr.mxu0 0.0
        %329 = vmatpush1.xpose.msra.mxu0 0.0
        %330 = vmatprep.subr.mxu0 0.0
        %331 = vmatpush1.xpose.msra.mxu0 0.0
        %332 = vmatprep.subr.mxu0 0.0
        %333 = vmatpush1.xpose.msra.mxu0 0.0
        %334 = vmatprep.subr.mxu0 0.0
        %335 = vmatpush1.xpose.msra.mxu0 0.0
        %336 = vmatprep.subr.mxu0 0.0
        %337 = vmatpush1.xpose.msra.mxu0 0.0
        %338 = vmatprep.subr.mxu0 0.0
        %339 = vmatpush1.xpose.msra.mxu0 0.0
        %340 = vmatprep.subr.mxu0 0.0
        %341 = vmatpush1.xpose.msra.mxu0 0.0
        %342 = vmatprep.subr.mxu0 0.0
        %343 = vmatpush1.xpose.msra.mxu0 0.0
        %344 = vmatprep.subr.mxu0 0.0
        %345 = vmatpush1.xpose.msra.mxu0 0.0
        %346 = vmatprep.subr.mxu0 0.0
        %347 = vmatpush1.xpose.msra.mxu0 0.0
        %348 = vmatprep.subr.mxu0 0.0
        %349 = vmatpush1.xpose.msra.mxu0 0.0
        %350 = vmatprep.subr.mxu0 0.0
        %351 = vmatpush1.xpose.msra.mxu0 0.0
        %352 = vmatprep.subr.mxu0 0.0
        %353 = vmatpush1.xpose.msra.mxu0 0.0
        %354 = vmatprep.subr.mxu0 0.0
        %355 = vmatpush1.xpose.msra.mxu0 0.0
        %356 = vmatprep.subr.mxu0 0.0
        %357 = vmatpush1.xpose.msra.mxu0 0.0
        %358 = vmatprep.subr.mxu0 0.0
        %359 = vmatpush1.xpose.msra.mxu0 0.0
        %360 = vmatprep.subr.mxu0 0.0
        %361 = vmatpush1.xpose.msra.mxu0 0.0
        %362 = vmatprep.subr.mxu0 0.0
        %363 = vmatpush1.xpose.msra.mxu0 0.0
        %364 = vmatprep.subr.mxu0 0.0
        %365 = vmatpush1.xpose.msra.mxu0 0.0
        %366 = vmatprep.subr.mxu0 0.0
        %367 = vmatpush1.xpose.msra.mxu0 0.0
        %368 = vmatprep.subr.mxu0 0.0
        %369 = vmatpush1.xpose.msra.mxu0 0.0
        %370 = vmatprep.subr.mxu0 0.0
        %371 = vmatpush1.xpose.msra.mxu0 0.0
        %372 = vmatprep.subr.mxu0 0.0
        %373 = vmatpush1.xpose.msra.mxu0 0.0
        %374 = vmatprep.subr.mxu0 0.0
        %375 = vmatpush1.xpose.msra.mxu0 0.0
        %376 = vmatprep.mubr.f32.mxu0 0.0
        %377 = vmatmul.mubr.f32.gmra.mrb[0].mxu0 %v308
        %v378 = vpop.f32.mrb[0].mxu0
        %v379 = vadd.f32 0.0, %v378
        %v380 = vpop.f32.mrb[0].mxu0
        %381 = vdwg.mxu0
        %v382 = vsel %vm303, %v379, -1e+30
        %383 = vrot.lane.b32.xlu0 %v296, 120
        %v384 = vpop.permute.xlu0 %383
        %385 = vrot.lane.b32.xlu0 %v296, 88
        %v386 = vpop.permute.xlu0 %385
        %v387 = vsel %vm307, %v384, 0
        %v389 = vsel %vm307, %v386, 0
        %391 = vmatprep.subr.mxu0 0.0
        %392 = vmatpush1.xpose.msra.mxu0 %v389
        %393 = vmatprep.subr.mxu0 0.0
        %394 = vmatpush1.xpose.msra.mxu0 0.0
        %395 = vmatprep.subr.mxu0 0.0
        %396 = vmatpush1.xpose.msra.mxu0 0.0
        %397 = vmatprep.subr.mxu0 0.0
        %398 = vmatpush1.xpose.msra.mxu0 0.0
        %399 = vmatprep.subr.mxu0 0.0
        %400 = vmatpush1.xpose.msra.mxu0 0.0
        %401 = vmatprep.subr.mxu0 0.0
        %402 = vmatpush1.xpose.msra.mxu0 0.0
        %403 = vmatprep.subr.mxu0 0.0
        %404 = vmatpush1.xpose.msra.mxu0 0.0
        %405 = vmatprep.subr.mxu0 0.0
        %406 = vmatpush1.xpose.msra.mxu0 0.0
        %407 = vmatprep.subr.mxu0 0.0
        %408 = vmatpush1.xpose.msra.mxu0 0.0
        %409 = vmatprep.subr.mxu0 0.0
        %410 = vmatpush1.xpose.msra.mxu0 0.0
        %411 = vmatprep.subr.mxu0 0.0
        %412 = vmatpush1.xpose.msra.mxu0 0.0
        %413 = vmatprep.subr.mxu0 0.0
        %414 = vmatpush1.xpose.msra.mxu0 0.0
        %415 = vmatprep.subr.mxu0 0.0
        %416 = vmatpush1.xpose.msra.mxu0 0.0
        %417 = vmatprep.subr.mxu0 0.0
        %418 = vmatpush1.xpose.msra.mxu0 0.0
        %419 = vmatprep.subr.mxu0 0.0
        %420 = vmatpush1.xpose.msra.mxu0 0.0
        %421 = vmatprep.subr.mxu0 0.0
        %422 = vmatpush1.xpose.msra.mxu0 0.0
        %423 = vmatprep.subr.mxu0 0.0
        %424 = vmatpush1.xpose.msra.mxu0 0.0
        %425 = vmatprep.subr.mxu0 0.0
        %426 = vmatpush1.xpose.msra.mxu0 0.0
        %427 = vmatprep.subr.mxu0 0.0
        %428 = vmatpush1.xpose.msra.mxu0 0.0
        %429 = vmatprep.subr.mxu0 0.0
        %430 = vmatpush1.xpose.msra.mxu0 0.0
        %431 = vmatprep.subr.mxu0 0.0
        %432 = vmatpush1.xpose.msra.mxu0 0.0
        %433 = vmatprep.subr.mxu0 0.0
        %434 = vmatpush1.xpose.msra.mxu0 0.0
        %435 = vmatprep.subr.mxu0 0.0
        %436 = vmatpush1.xpose.msra.mxu0 0.0
        %437 = vmatprep.subr.mxu0 0.0
        %438 = vmatpush1.xpose.msra.mxu0 0.0
        %439 = vmatprep.subr.mxu0 0.0
        %440 = vmatpush1.xpose.msra.mxu0 0.0
        %441 = vmatprep.subr.mxu0 0.0
        %442 = vmatpush1.xpose.msra.mxu0 0.0
        %443 = vmatprep.subr.mxu0 0.0
        %444 = vmatpush1.xpose.msra.mxu0 0.0
        %445 = vmatprep.subr.mxu0 0.0
        %446 = vmatpush1.xpose.msra.mxu0 0.0
        %447 = vmatprep.subr.mxu0 0.0
        %448 = vmatpush1.xpose.msra.mxu0 0.0
        %449 = vmatprep.subr.mxu0 0.0
        %450 = vmatpush1.xpose.msra.mxu0 0.0
        %451 = vmatprep.subr.mxu0 0.0
        %452 = vmatpush1.xpose.msra.mxu0 0.0
        %453 = vmatprep.subr.mxu0 0.0
        %454 = vmatpush1.xpose.msra.mxu0 0.0
        %455 = vmatprep.mubr.f32.mxu0 0.0
        %456 = vmatmul.mubr.f32.gmra.mrb[0].mxu0 %v387
        %v457 = vpop.f32.mrb[0].mxu0
        %v458 = vadd.f32 0.0, %v457
        %v459 = vpop.f32.mrb[0].mxu0
        %460 = vdwg.mxu0
        %v461 = vsel %vm303, %v458, -1e+30
        %462 = vrot.lane.b32.xlu0 %v296, 112
        %v463 = vpop.permute.xlu0 %462
        %464 = vrot.lane.b32.xlu0 %v296, 80
        %v465 = vpop.permute.xlu0 %464
        %v466 = vsel %vm307, %v463, 0
        %v468 = vsel %vm307, %v465, 0
        %470 = vmatprep.subr.mxu0 0.0
        %471 = vmatpush1.xpose.msra.mxu0 %v468
        %472 = vmatprep.subr.mxu0 0.0
        %473 = vmatpush1.xpose.msra.mxu0 0.0
        %474 = vmatprep.subr.mxu0 0.0
        %475 = vmatpush1.xpose.msra.mxu0 0.0
        %476 = vmatprep.subr.mxu0 0.0
        %477 = vmatpush1.xpose.msra.mxu0 0.0
        %478 = vmatprep.subr.mxu0 0.0
        %479 = vmatpush1.xpose.msra.mxu0 0.0
        %480 = vmatprep.subr.mxu0 0.0
        %481 = vmatpush1.xpose.msra.mxu0 0.0
        %482 = vmatprep.subr.mxu0 0.0
        %483 = vmatpush1.xpose.msra.mxu0 0.0
        %484 = vmatprep.subr.mxu0 0.0
        %485 = vmatpush1.xpose.msra.mxu0 0.0
        %486 = vmatprep.subr.mxu0 0.0
        %487 = vmatpush1.xpose.msra.mxu0 0.0
        %488 = vmatprep.subr.mxu0 0.0
        %489 = vmatpush1.xpose.msra.mxu0 0.0
        %490 = vmatprep.subr.mxu0 0.0
        %491 = vmatpush1.xpose.msra.mxu0 0.0
        %492 = vmatprep.subr.mxu0 0.0
        %493 = vmatpush1.xpose.msra.mxu0 0.0
        %494 = vmatprep.subr.mxu0 0.0
        %495 = vmatpush1.xpose.msra.mxu0 0.0
        %496 = vmatprep.subr.mxu0 0.0
        %497 = vmatpush1.xpose.msra.mxu0 0.0
        %498 = vmatprep.subr.mxu0 0.0
        %499 = vmatpush1.xpose.msra.mxu0 0.0
        %500 = vmatprep.subr.mxu0 0.0
        %501 = vmatpush1.xpose.msra.mxu0 0.0
        %502 = vmatprep.subr.mxu0 0.0
        %503 = vmatpush1.xpose.msra.mxu0 0.0
        %504 = vmatprep.subr.mxu0 0.0
        %505 = vmatpush1.xpose.msra.mxu0 0.0
        %506 = vmatprep.subr.mxu0 0.0
        %507 = vmatpush1.xpose.msra.mxu0 0.0
        %508 = vmatprep.subr.mxu0 0.0
        %509 = vmatpush1.xpose.msra.mxu0 0.0
        %510 = vmatprep.subr.mxu0 0.0
        %511 = vmatpush1.xpose.msra.mxu0 0.0
        %512 = vmatprep.subr.mxu0 0.0
        %513 = vmatpush1.xpose.msra.mxu0 0.0
        %514 = vmatprep.subr.mxu0 0.0
        %515 = vmatpush1.xpose.msra.mxu0 0.0
        %516 = vmatprep.subr.mxu0 0.0
        %517 = vmatpush1.xpose.msra.mxu0 0.0
        %518 = vmatprep.subr.mxu0 0.0
        %519 = vmatpush1.xpose.msra.mxu0 0.0
        %520 = vmatprep.subr.mxu0 0.0
        %521 = vmatpush1.xpose.msra.mxu0 0.0
        %522 = vmatprep.subr.mxu0 0.0
        %523 = vmatpush1.xpose.msra.mxu0 0.0
        %524 = vmatprep.subr.mxu0 0.0
        %525 = vmatpush1.xpose.msra.mxu0 0.0
        %526 = vmatprep.subr.mxu0 0.0
        %527 = vmatpush1.xpose.msra.mxu0 0.0
        %528 = vmatprep.subr.mxu0 0.0
        %529 = vmatpush1.xpose.msra.mxu0 0.0
        %530 = vmatprep.subr.mxu0 0.0
        %531 = vmatpush1.xpose.msra.mxu0 0.0
        %532 = vmatprep.subr.mxu0 0.0
        %533 = vmatpush1.xpose.msra.mxu0 0.0
        %534 = vmatprep.mubr.f32.mxu0 0.0
        %535 = vmatmul.mubr.f32.gmra.mrb[0].mxu0 %v466
        %v536 = vpop.f32.mrb[0].mxu0
        %v537 = vadd.f32 0.0, %v536
        %v538 = vpop.f32.mrb[0].mxu0
        %539 = vdwg.mxu0
        %v540 = vsel %vm303, %v537, -1e+30
        %541 = vrot.lane.b32.xlu0 %v296, 104
        %v542 = vpop.permute.xlu0 %541
        %543 = vrot.lane.b32.xlu0 %v296, 72
        %v544 = vpop.permute.xlu0 %543
        %v545 = vsel %vm307, %v542, 0
        %v547 = vsel %vm307, %v544, 0
        %549 = vmatprep.subr.mxu0 0.0
        %550 = vmatpush1.xpose.msra.mxu0 %v547
        %551 = vmatprep.subr.mxu0 0.0
        %552 = vmatpush1.xpose.msra.mxu0 0.0
        %553 = vmatprep.subr.mxu0 0.0
        %554 = vmatpush1.xpose.msra.mxu0 0.0
        %555 = vmatprep.subr.mxu0 0.0
        %556 = vmatpush1.xpose.msra.mxu0 0.0
        %557 = vmatprep.subr.mxu0 0.0
        %558 = vmatpush1.xpose.msra.mxu0 0.0
        %559 = vmatprep.subr.mxu0 0.0
        %560 = vmatpush1.xpose.msra.mxu0 0.0
        %561 = vmatprep.subr.mxu0 0.0
        %562 = vmatpush1.xpose.msra.mxu0 0.0
        %563 = vmatprep.subr.mxu0 0.0
        %564 = vmatpush1.xpose.msra.mxu0 0.0
        %565 = vmatprep.subr.mxu0 0.0
        %566 = vmatpush1.xpose.msra.mxu0 0.0
        %567 = vmatprep.subr.mxu0 0.0
        %568 = vmatpush1.xpose.msra.mxu0 0.0
        %569 = vmatprep.subr.mxu0 0.0
        %570 = vmatpush1.xpose.msra.mxu0 0.0
        %571 = vmatprep.subr.mxu0 0.0
        %572 = vmatpush1.xpose.msra.mxu0 0.0
        %573 = vmatprep.subr.mxu0 0.0
        %574 = vmatpush1.xpose.msra.mxu0 0.0
        %575 = vmatprep.subr.mxu0 0.0
        %576 = vmatpush1.xpose.msra.mxu0 0.0
        %577 = vmatprep.subr.mxu0 0.0
        %578 = vmatpush1.xpose.msra.mxu0 0.0
        %579 = vmatprep.subr.mxu0 0.0
        %580 = vmatpush1.xpose.msra.mxu0 0.0
        %581 = vmatprep.subr.mxu0 0.0
        %582 = vmatpush1.xpose.msra.mxu0 0.0
        %583 = vmatprep.subr.mxu0 0.0
        %584 = vmatpush1.xpose.msra.mxu0 0.0
        %585 = vmatprep.subr.mxu0 0.0
        %586 = vmatpush1.xpose.msra.mxu0 0.0
        %587 = vmatprep.subr.mxu0 0.0
        %588 = vmatpush1.xpose.msra.mxu0 0.0
        %589 = vmatprep.subr.mxu0 0.0
        %590 = vmatpush1.xpose.msra.mxu0 0.0
        %591 = vmatprep.subr.mxu0 0.0
        %592 = vmatpush1.xpose.msra.mxu0 0.0
        %593 = vmatprep.subr.mxu0 0.0
        %594 = vmatpush1.xpose.msra.mxu0 0.0
        %595 = vmatprep.subr.mxu0 0.0
        %596 = vmatpush1.xpose.msra.mxu0 0.0
        %597 = vmatprep.subr.mxu0 0.0
        %598 = vmatpush1.xpose.msra.mxu0 0.0
        %599 = vmatprep.subr.mxu0 0.0
        %600 = vmatpush1.xpose.msra.mxu0 0.0
        %601 = vmatprep.subr.mxu0 0.0
        %602 = vmatpush1.xpose.msra.mxu0 0.0
        %603 = vmatprep.subr.mxu0 0.0
        %604 = vmatpush1.xpose.msra.mxu0 0.0
        %605 = vmatprep.subr.mxu0 0.0
        %606 = vmatpush1.xpose.msra.mxu0 0.0
        %607 = vmatprep.subr.mxu0 0.0
        %608 = vmatpush1.xpose.msra.mxu0 0.0
        %609 = vmatprep.subr.mxu0 0.0
        %610 = vmatpush1.xpose.msra.mxu0 0.0
        %611 = vmatprep.subr.mxu0 0.0
        %612 = vmatpush1.xpose.msra.mxu0 0.0
        %613 = vmatprep.mubr.f32.mxu0 0.0
        %614 = vmatmul.mubr.f32.gmra.mrb[0].mxu0 %v545
        %v615 = vpop.f32.mrb[0].mxu0
        %v616 = vadd.f32 0.0, %v615
        %v617 = vpop.f32.mrb[0].mxu0
        %618 = vdwg.mxu0
        %v619 = vsel %vm303, %v616, -1e+30
        %v620 = vsel %vm307, %v382, -inf
        %621 = vmax.xlane.f32.xlu0 %v620
        %v622 = vpop.xlane.xlu0 %621
        %v623 = vsel %vm307, %v461, -inf
        %624 = vmax.xlane.f32.xlu0 %v623
        %v625 = vpop.xlane.xlu0 %624
        %v626 = vsel %vm307, %v540, -inf
        %627 = vmax.xlane.f32.xlu0 %v626
        %v628 = vpop.xlane.xlu0 %627
        %v629 = vsel %vm307, %v619, -inf
        %630 = vmax.xlane.f32.xlu0 %v629
        %v631 = vpop.xlane.xlu0 %630
        %v632 = vsub.f32 %v382, %v622
        %v633 = vsub.f32 %v461, %v625
        %v634 = vsub.f32 %v540, %v628
        %v635 = vsub.f32 %v619, %v631
        %v636 = vmul.f32 %v632, 1.442695
        %v637 = vpow.pop %v636
        %v638 = vmul.f32 %v633, 1.442695
        %v639 = vpow.pop %v638
        %v640 = vmul.f32 %v634, 1.442695
        %v641 = vpow.pop %v640
        %v642 = vmul.f32 %v635, 1.442695
        %v643 = vpow.pop %v642
        %v644 = vsel %vm307, %v637, 0.0
        %645 = vadd.xlane.f32.xlu0 %v644
        %v646 = vpop.xlane.xlu0 %645
        %v647 = vsel %vm307, %v639, 0.0
        %648 = vadd.xlane.f32.xlu0 %v647
        %v649 = vpop.xlane.xlu0 %648
        %v650 = vsel %vm307, %v641, 0.0
        %651 = vadd.xlane.f32.xlu0 %v650
        %v652 = vpop.xlane.xlu0 %651
        %v653 = vsel %vm307, %v643, 0.0
        %654 = vadd.xlane.f32.xlu0 %v653
        %v655 = vpop.xlane.xlu0 %654
        %v656 = vrcp.pop %v646
        %v657 = vrcp.pop %v649
        %v658 = vrcp.pop %v652
        %v659 = vrcp.pop %v655
        %v660 = vmul.f32 %v637, %v656
        %v661 = vmul.f32 %v639, %v657
        %v662 = vmul.f32 %v641, %v658
        %v663 = vmul.f32 %v643, %v659
        %664 = vrot.lane.b32.xlu0 %v296, 64
        %v665 = vpop.permute.xlu0 %664
        %v668 = vsel %vm307, %v660, 0
        %670 = vmatprep.subr.mxu0 0.0
        %671 = vmatpush1.msra.mxu0 %v665
        %672 = vmatprep.subr.mxu0 0.0
        %673 = vmatpush1.msra.mxu0 0.0
        %674 = vmatprep.subr.mxu0 0.0
        %675 = vmatpush1.msra.mxu0 0.0
        %676 = vmatprep.subr.mxu0 0.0
        %677 = vmatpush1.msra.mxu0 0.0
        %678 = vmatprep.subr.mxu0 0.0
        %679 = vmatpush1.msra.mxu0 0.0
        %680 = vmatprep.subr.mxu0 0.0
        %681 = vmatpush1.msra.mxu0 0.0
        %682 = vmatprep.subr.mxu0 0.0
        %683 = vmatpush1.msra.mxu0 0.0
        %684 = vmatprep.subr.mxu0 0.0
        %685 = vmatpush1.msra.mxu0 0.0
        %686 = vmatprep.subr.mxu0 0.0
        %687 = vmatpush1.msra.mxu0 0.0
        %688 = vmatprep.subr.mxu0 0.0
        %689 = vmatpush1.msra.mxu0 0.0
        %690 = vmatprep.subr.mxu0 0.0
        %691 = vmatpush1.msra.mxu0 0.0
        %692 = vmatprep.subr.mxu0 0.0
        %693 = vmatpush1.msra.mxu0 0.0
        %694 = vmatprep.subr.mxu0 0.0
        %695 = vmatpush1.msra.mxu0 0.0
        %696 = vmatprep.subr.mxu0 0.0
        %697 = vmatpush1.msra.mxu0 0.0
        %698 = vmatprep.subr.mxu0 0.0
        %699 = vmatpush1.msra.mxu0 0.0
        %700 = vmatprep.subr.mxu0 0.0
        %701 = vmatpush1.msra.mxu0 0.0
        %702 = vmatprep.subr.mxu0 0.0
        %703 = vmatpush1.msra.mxu0 0.0
        %704 = vmatprep.subr.mxu0 0.0
        %705 = vmatpush1.msra.mxu0 0.0
        %706 = vmatprep.subr.mxu0 0.0
        %707 = vmatpush1.msra.mxu0 0.0
        %708 = vmatprep.subr.mxu0 0.0
        %709 = vmatpush1.msra.mxu0 0.0
        %710 = vmatprep.subr.mxu0 0.0
        %711 = vmatpush1.msra.mxu0 0.0
        %712 = vmatprep.subr.mxu0 0.0
        %713 = vmatpush1.msra.mxu0 0.0
        %714 = vmatprep.subr.mxu0 0.0
        %715 = vmatpush1.msra.mxu0 0.0
        %716 = vmatprep.subr.mxu0 0.0
        %717 = vmatpush1.msra.mxu0 0.0
        %718 = vmatprep.subr.mxu0 0.0
        %719 = vmatpush1.msra.mxu0 0.0
        %720 = vmatprep.subr.mxu0 0.0
        %721 = vmatpush1.msra.mxu0 0.0
        %722 = vmatprep.subr.mxu0 0.0
        %723 = vmatpush1.msra.mxu0 0.0
        %724 = vmatprep.subr.mxu0 0.0
        %725 = vmatpush1.msra.mxu0 0.0
        %726 = vmatprep.subr.mxu0 0.0
        %727 = vmatpush1.msra.mxu0 0.0
        %728 = vmatprep.subr.mxu0 0.0
        %729 = vmatpush1.msra.mxu0 0.0
        %730 = vmatprep.subr.mxu0 0.0
        %731 = vmatpush1.msra.mxu0 0.0
        %732 = vmatprep.subr.mxu0 0.0
        %733 = vmatpush1.msra.mxu0 0.0
        %734 = vmatprep.mubr.f32.mxu0 0.0
        %735 = vmatmul.mubr.f32.gmra.mrb[0].mxu0 %v668
        %v736 = vpop.f32.mrb[0].mxu0
        %v737 = vadd.f32 0.0, %v736
        %v738 = vpop.f32.mrb[0].mxu0
        %739 = vdwg.mxu0
        %740 = vrot.lane.b32.xlu0 %v296, 56
        %v741 = vpop.permute.xlu0 %740
        %v744 = vsel %vm307, %v661, 0
        %746 = vmatprep.subr.mxu0 0.0
        %747 = vmatpush1.msra.mxu0 %v741
        %748 = vmatprep.subr.mxu0 0.0
        %749 = vmatpush1.msra.mxu0 0.0
        %750 = vmatprep.subr.mxu0 0.0
        %751 = vmatpush1.msra.mxu0 0.0
        %752 = vmatprep.subr.mxu0 0.0
        %753 = vmatpush1.msra.mxu0 0.0
        %754 = vmatprep.subr.mxu0 0.0
        %755 = vmatpush1.msra.mxu0 0.0
        %756 = vmatprep.subr.mxu0 0.0
        %757 = vmatpush1.msra.mxu0 0.0
        %758 = vmatprep.subr.mxu0 0.0
        %759 = vmatpush1.msra.mxu0 0.0
        %760 = vmatprep.subr.mxu0 0.0
        %761 = vmatpush1.msra.mxu0 0.0
        %762 = vmatprep.subr.mxu0 0.0
        %763 = vmatpush1.msra.mxu0 0.0
        %764 = vmatprep.subr.mxu0 0.0
        %765 = vmatpush1.msra.mxu0 0.0
        %766 = vmatprep.subr.mxu0 0.0
        %767 = vmatpush1.msra.mxu0 0.0
        %768 = vmatprep.subr.mxu0 0.0
        %769 = vmatpush1.msra.mxu0 0.0
        %770 = vmatprep.subr.mxu0 0.0
        %771 = vmatpush1.msra.mxu0 0.0
        %772 = vmatprep.subr.mxu0 0.0
        %773 = vmatpush1.msra.mxu0 0.0
        %774 = vmatprep.subr.mxu0 0.0
        %775 = vmatpush1.msra.mxu0 0.0
        %776 = vmatprep.subr.mxu0 0.0
        %777 = vmatpush1.msra.mxu0 0.0
        %778 = vmatprep.subr.mxu0 0.0
        %779 = vmatpush1.msra.mxu0 0.0
        %780 = vmatprep.subr.mxu0 0.0
        %781 = vmatpush1.msra.mxu0 0.0
        %782 = vmatprep.subr.mxu0 0.0
        %783 = vmatpush1.msra.mxu0 0.0
        %784 = vmatprep.subr.mxu0 0.0
        %785 = vmatpush1.msra.mxu0 0.0
        %786 = vmatprep.subr.mxu0 0.0
        %787 = vmatpush1.msra.mxu0 0.0
        %788 = vmatprep.subr.mxu0 0.0
        %789 = vmatpush1.msra.mxu0 0.0
        %790 = vmatprep.subr.mxu0 0.0
        %791 = vmatpush1.msra.mxu0 0.0
        %792 = vmatprep.subr.mxu0 0.0
        %793 = vmatpush1.msra.mxu0 0.0
        %794 = vmatprep.subr.mxu0 0.0
        %795 = vmatpush1.msra.mxu0 0.0
        %796 = vmatprep.subr.mxu0 0.0
        %797 = vmatpush1.msra.mxu0 0.0
        %798 = vmatprep.subr.mxu0 0.0
        %799 = vmatpush1.msra.mxu0 0.0
        %800 = vmatprep.subr.mxu0 0.0
        %801 = vmatpush1.msra.mxu0 0.0
        %802 = vmatprep.subr.mxu0 0.0
        %803 = vmatpush1.msra.mxu0 0.0
        %804 = vmatprep.subr.mxu0 0.0
        %805 = vmatpush1.msra.mxu0 0.0
        %806 = vmatprep.subr.mxu0 0.0
        %807 = vmatpush1.msra.mxu0 0.0
        %808 = vmatprep.subr.mxu0 0.0
        %809 = vmatpush1.msra.mxu0 0.0
        %810 = vmatprep.mubr.f32.mxu0 0.0
        %811 = vmatmul.mubr.f32.gmra.mrb[0].mxu0 %v744
        %v812 = vpop.f32.mrb[0].mxu0
        %v813 = vadd.f32 0.0, %v812
        %v814 = vpop.f32.mrb[0].mxu0
        %815 = vdwg.mxu0
        %v817 = vsel %vm307, %v813, 0
        %819 = vmatprep.subr.mxu0 0.0
        %820 = vmatpush1.msra.mxu0 %v180
        %821 = vmatprep.subr.mxu0 0.0
        %822 = vmatpush1.msra.mxu0 0.0
        %823 = vmatprep.subr.mxu0 0.0
        %824 = vmatpush1.msra.mxu0 0.0
        %825 = vmatprep.subr.mxu0 0.0
        %826 = vmatpush1.msra.mxu0 0.0
        %827 = vmatprep.subr.mxu0 0.0
        %828 = vmatpush1.msra.mxu0 0.0
        %829 = vmatprep.subr.mxu0 0.0
        %830 = vmatpush1.msra.mxu0 0.0
        %831 = vmatprep.subr.mxu0 0.0
        %832 = vmatpush1.msra.mxu0 0.0
        %833 = vmatprep.subr.mxu0 0.0
        %834 = vmatpush1.msra.mxu0 0.0
        %835 = vmatprep.subr.mxu0 0.0
        %836 = vmatpush1.msra.mxu0 0.0
        %837 = vmatprep.subr.mxu0 0.0
        %838 = vmatpush1.msra.mxu0 0.0
        %839 = vmatprep.subr.mxu0 0.0
        %840 = vmatpush1.msra.mxu0 0.0
        %841 = vmatprep.subr.mxu0 0.0
        %842 = vmatpush1.msra.mxu0 0.0
        %843 = vmatprep.subr.mxu0 0.0
        %844 = vmatpush1.msra.mxu0 0.0
        %845 = vmatprep.subr.mxu0 0.0
        %846 = vmatpush1.msra.mxu0 0.0
        %847 = vmatprep.subr.mxu0 0.0
        %848 = vmatpush1.msra.mxu0 0.0
        %849 = vmatprep.subr.mxu0 0.0
        %850 = vmatpush1.msra.mxu0 0.0
        %851 = vmatprep.subr.mxu0 0.0
        %852 = vmatpush1.msra.mxu0 0.0
        %853 = vmatprep.subr.mxu0 0.0
        %854 = vmatpush1.msra.mxu0 0.0
        %855 = vmatprep.subr.mxu0 0.0
        %856 = vmatpush1.msra.mxu0 0.0
        %857 = vmatprep.subr.mxu0 0.0
        %858 = vmatpush1.msra.mxu0 0.0
        %859 = vmatprep.subr.mxu0 0.0
        %860 = vmatpush1.msra.mxu0 0.0
        %861 = vmatprep.subr.mxu0 0.0
        %862 = vmatpush1.msra.mxu0 0.0
        %863 = vmatprep.subr.mxu0 0.0
        %864 = vmatpush1.msra.mxu0 0.0
        %865 = vmatprep.subr.mxu0 0.0
        %866 = vmatpush1.msra.mxu0 0.0
        %867 = vmatprep.subr.mxu0 0.0
        %868 = vmatpush1.msra.mxu0 0.0
        %869 = vmatprep.subr.mxu0 0.0
        %870 = vmatpush1.msra.mxu0 0.0
        %871 = vmatprep.subr.mxu0 0.0
        %872 = vmatpush1.msra.mxu0 0.0
        %873 = vmatprep.subr.mxu0 0.0
        %874 = vmatpush1.msra.mxu0 0.0
        %875 = vmatprep.subr.mxu0 0.0
        %876 = vmatpush1.msra.mxu0 0.0
        %877 = vmatprep.subr.mxu0 0.0
        %878 = vmatpush1.msra.mxu0 0.0
        %879 = vmatprep.subr.mxu0 0.0
        %880 = vmatpush1.msra.mxu0 0.0
        %881 = vmatprep.subr.mxu0 0.0
        %882 = vmatpush1.msra.mxu0 0.0
        %883 = vmatprep.mubr.f32.mxu0 0.0
        %884 = vmatmul.mubr.f32.gmra.mrb[0].mxu0 %v817
        %v885 = vpop.f32.mrb[0].mxu0
        %v886 = vadd.f32 0.0, %v885
        %v887 = vpop.f32.mrb[0].mxu0
        %888 = vdwg.mxu0
        %v890 = vsel %vm307, %v737, 0
        %892 = vmatprep.subr.mxu0 0.0
        %893 = vmatpush1.msra.mxu0 %v179
        %894 = vmatprep.subr.mxu0 0.0
        %895 = vmatpush1.msra.mxu0 0.0
        %896 = vmatprep.subr.mxu0 0.0
        %897 = vmatpush1.msra.mxu0 0.0
        %898 = vmatprep.subr.mxu0 0.0
        %899 = vmatpush1.msra.mxu0 0.0
        %900 = vmatprep.subr.mxu0 0.0
        %901 = vmatpush1.msra.mxu0 0.0
        %902 = vmatprep.subr.mxu0 0.0
        %903 = vmatpush1.msra.mxu0 0.0
        %904 = vmatprep.subr.mxu0 0.0
        %905 = vmatpush1.msra.mxu0 0.0
        %906 = vmatprep.subr.mxu0 0.0
        %907 = vmatpush1.msra.mxu0 0.0
        %908 = vmatprep.subr.mxu0 0.0
        %909 = vmatpush1.msra.mxu0 0.0
        %910 = vmatprep.subr.mxu0 0.0
        %911 = vmatpush1.msra.mxu0 0.0
        %912 = vmatprep.subr.mxu0 0.0
        %913 = vmatpush1.msra.mxu0 0.0
        %914 = vmatprep.subr.mxu0 0.0
        %915 = vmatpush1.msra.mxu0 0.0
        %916 = vmatprep.subr.mxu0 0.0
        %917 = vmatpush1.msra.mxu0 0.0
        %918 = vmatprep.subr.mxu0 0.0
        %919 = vmatpush1.msra.mxu0 0.0
        %920 = vmatprep.subr.mxu0 0.0
        %921 = vmatpush1.msra.mxu0 0.0
        %922 = vmatprep.subr.mxu0 0.0
        %923 = vmatpush1.msra.mxu0 0.0
        %924 = vmatprep.subr.mxu0 0.0
        %925 = vmatpush1.msra.mxu0 0.0
        %926 = vmatprep.subr.mxu0 0.0
        %927 = vmatpush1.msra.mxu0 0.0
        %928 = vmatprep.subr.mxu0 0.0
        %929 = vmatpush1.msra.mxu0 0.0
        %930 = vmatprep.subr.mxu0 0.0
        %931 = vmatpush1.msra.mxu0 0.0
        %932 = vmatprep.subr.mxu0 0.0
        %933 = vmatpush1.msra.mxu0 0.0
        %934 = vmatprep.subr.mxu0 0.0
        %935 = vmatpush1.msra.mxu0 0.0
        %936 = vmatprep.subr.mxu0 0.0
        %937 = vmatpush1.msra.mxu0 0.0
        %938 = vmatprep.subr.mxu0 0.0
        %939 = vmatpush1.msra.mxu0 0.0
        %940 = vmatprep.subr.mxu0 0.0
        %941 = vmatpush1.msra.mxu0 0.0
        %942 = vmatprep.subr.mxu0 0.0
        %943 = vmatpush1.msra.mxu0 0.0
        %944 = vmatprep.subr.mxu0 0.0
        %945 = vmatpush1.msra.mxu0 0.0
        %946 = vmatprep.subr.mxu0 0.0
        %947 = vmatpush1.msra.mxu0 0.0
        %948 = vmatprep.subr.mxu0 0.0
        %949 = vmatpush1.msra.mxu0 0.0
        %950 = vmatprep.subr.mxu0 0.0
        %951 = vmatpush1.msra.mxu0 0.0
        %952 = vmatprep.subr.mxu0 0.0
        %953 = vmatpush1.msra.mxu0 0.0
        %954 = vmatprep.subr.mxu0 0.0
        %955 = vmatpush1.msra.mxu0 0.0
        %956 = vmatprep.mubr.f32.mxu0 0.0
        %957 = vmatmul.mubr.f32.gmra.mrb[0].mxu0 %v890
        %v958 = vpop.f32.mrb[0].mxu0
        %v959 = vadd.f32 %v886, %v958
        %v960 = vpop.f32.mrb[0].mxu0
        %961 = vdwg.mxu0
        %962 = vrot.lane.b32.xlu0 %v296, 48
        %v963 = vpop.permute.xlu0 %962
        %v966 = vsel %vm307, %v662, 0
        %968 = vmatprep.subr.mxu0 0.0
        %969 = vmatpush1.msra.mxu0 %v963
        %970 = vmatprep.subr.mxu0 0.0
        %971 = vmatpush1.msra.mxu0 0.0
        %972 = vmatprep.subr.mxu0 0.0
        %973 = vmatpush1.msra.mxu0 0.0
        %974 = vmatprep.subr.mxu0 0.0
        %975 = vmatpush1.msra.mxu0 0.0
        %976 = vmatprep.subr.mxu0 0.0
        %977 = vmatpush1.msra.mxu0 0.0
        %978 = vmatprep.subr.mxu0 0.0
        %979 = vmatpush1.msra.mxu0 0.0
        %980 = vmatprep.subr.mxu0 0.0
        %981 = vmatpush1.msra.mxu0 0.0
        %982 = vmatprep.subr.mxu0 0.0
        %983 = vmatpush1.msra.mxu0 0.0
        %984 = vmatprep.subr.mxu0 0.0
        %985 = vmatpush1.msra.mxu0 0.0
        %986 = vmatprep.subr.mxu0 0.0
        %987 = vmatpush1.msra.mxu0 0.0
        %988 = vmatprep.subr.mxu0 0.0
        %989 = vmatpush1.msra.mxu0 0.0
        %990 = vmatprep.subr.mxu0 0.0
        %991 = vmatpush1.msra.mxu0 0.0
        %992 = vmatprep.subr.mxu0 0.0
        %993 = vmatpush1.msra.mxu0 0.0
        %994 = vmatprep.subr.mxu0 0.0
        %995 = vmatpush1.msra.mxu0 0.0
        %996 = vmatprep.subr.mxu0 0.0
        %997 = vmatpush1.msra.mxu0 0.0
        %998 = vmatprep.subr.mxu0 0.0
        %999 = vmatpush1.msra.mxu0 0.0
        %1000 = vmatprep.subr.mxu0 0.0
        %1001 = vmatpush1.msra.mxu0 0.0
        %1002 = vmatprep.subr.mxu0 0.0
        %1003 = vmatpush1.msra.mxu0 0.0
        %1004 = vmatprep.subr.mxu0 0.0
        %1005 = vmatpush1.msra.mxu0 0.0
        %1006 = vmatprep.subr.mxu0 0.0
        %1007 = vmatpush1.msra.mxu0 0.0
        %1008 = vmatprep.subr.mxu0 0.0
        %1009 = vmatpush1.msra.mxu0 0.0
        %1010 = vmatprep.subr.mxu0 0.0
        %1011 = vmatpush1.msra.mxu0 0.0
        %1012 = vmatprep.subr.mxu0 0.0
        %1013 = vmatpush1.msra.mxu0 0.0
        %1014 = vmatprep.subr.mxu0 0.0
        %1015 = vmatpush1.msra.mxu0 0.0
        %1016 = vmatprep.subr.mxu0 0.0
        %1017 = vmatpush1.msra.mxu0 0.0
        %1018 = vmatprep.subr.mxu0 0.0
        %1019 = vmatpush1.msra.mxu0 0.0
        %1020 = vmatprep.subr.mxu0 0.0
        %1021 = vmatpush1.msra.mxu0 0.0
        %1022 = vmatprep.subr.mxu0 0.0
        %1023 = vmatpush1.msra.mxu0 0.0
        %1024 = vmatprep.subr.mxu0 0.0
        %1025 = vmatpush1.msra.mxu0 0.0
        %1026 = vmatprep.subr.mxu0 0.0
        %1027 = vmatpush1.msra.mxu0 0.0
        %1028 = vmatprep.subr.mxu0 0.0
        %1029 = vmatpush1.msra.mxu0 0.0
        %1030 = vmatprep.subr.mxu0 0.0
        %1031 = vmatpush1.msra.mxu0 0.0
        %1032 = vmatprep.mubr.f32.mxu0 0.0
        %1033 = vmatmul.mubr.f32.gmra.mrb[0].mxu0 %v966
        %v1034 = vpop.f32.mrb[0].mxu0
        %v1035 = vadd.f32 0.0, %v1034
        %v1036 = vpop.f32.mrb[0].mxu0
        %1037 = vdwg.mxu0
        %v1039 = vsel %vm307, %v1035, 0
        %1041 = vmatprep.subr.mxu0 0.0
        %1042 = vmatpush1.msra.mxu0 %v181
        %1043 = vmatprep.subr.mxu0 0.0
        %1044 = vmatpush1.msra.mxu0 0.0
        %1045 = vmatprep.subr.mxu0 0.0
        %1046 = vmatpush1.msra.mxu0 0.0
        %1047 = vmatprep.subr.mxu0 0.0
        %1048 = vmatpush1.msra.mxu0 0.0
        %1049 = vmatprep.subr.mxu0 0.0
        %1050 = vmatpush1.msra.mxu0 0.0
        %1051 = vmatprep.subr.mxu0 0.0
        %1052 = vmatpush1.msra.mxu0 0.0
        %1053 = vmatprep.subr.mxu0 0.0
        %1054 = vmatpush1.msra.mxu0 0.0
        %1055 = vmatprep.subr.mxu0 0.0
        %1056 = vmatpush1.msra.mxu0 0.0
        %1057 = vmatprep.subr.mxu0 0.0
        %1058 = vmatpush1.msra.mxu0 0.0
        %1059 = vmatprep.subr.mxu0 0.0
        %1060 = vmatpush1.msra.mxu0 0.0
        %1061 = vmatprep.subr.mxu0 0.0
        %1062 = vmatpush1.msra.mxu0 0.0
        %1063 = vmatprep.subr.mxu0 0.0
        %1064 = vmatpush1.msra.mxu0 0.0
        %1065 = vmatprep.subr.mxu0 0.0
        %1066 = vmatpush1.msra.mxu0 0.0
        %1067 = vmatprep.subr.mxu0 0.0
        %1068 = vmatpush1.msra.mxu0 0.0
        %1069 = vmatprep.subr.mxu0 0.0
        %1070 = vmatpush1.msra.mxu0 0.0
        %1071 = vmatprep.subr.mxu0 0.0
        %1072 = vmatpush1.msra.mxu0 0.0
        %1073 = vmatprep.subr.mxu0 0.0
        %1074 = vmatpush1.msra.mxu0 0.0
        %1075 = vmatprep.subr.mxu0 0.0
        %1076 = vmatpush1.msra.mxu0 0.0
        %1077 = vmatprep.subr.mxu0 0.0
        %1078 = vmatpush1.msra.mxu0 0.0
        %1079 = vmatprep.subr.mxu0 0.0
        %1080 = vmatpush1.msra.mxu0 0.0
        %1081 = vmatprep.subr.mxu0 0.0
        %1082 = vmatpush1.msra.mxu0 0.0
        %1083 = vmatprep.subr.mxu0 0.0
        %1084 = vmatpush1.msra.mxu0 0.0
        %1085 = vmatprep.subr.mxu0 0.0
        %1086 = vmatpush1.msra.mxu0 0.0
        %1087 = vmatprep.subr.mxu0 0.0
        %1088 = vmatpush1.msra.mxu0 0.0
        %1089 = vmatprep.subr.mxu0 0.0
        %1090 = vmatpush1.msra.mxu0 0.0
        %1091 = vmatprep.subr.mxu0 0.0
        %1092 = vmatpush1.msra.mxu0 0.0
        %1093 = vmatprep.subr.mxu0 0.0
        %1094 = vmatpush1.msra.mxu0 0.0
        %1095 = vmatprep.subr.mxu0 0.0
        %1096 = vmatpush1.msra.mxu0 0.0
        %1097 = vmatprep.subr.mxu0 0.0
        %1098 = vmatpush1.msra.mxu0 0.0
        %1099 = vmatprep.subr.mxu0 0.0
        %1100 = vmatpush1.msra.mxu0 0.0
        %1101 = vmatprep.subr.mxu0 0.0
        %1102 = vmatpush1.msra.mxu0 0.0
        %1103 = vmatprep.subr.mxu0 0.0
        %1104 = vmatpush1.msra.mxu0 0.0
        %1105 = vmatprep.mubr.f32.mxu0 0.0
        %1106 = vmatmul.mubr.f32.gmra.mrb[0].mxu0 %v1039
        %v1107 = vpop.f32.mrb[0].mxu0
        %v1108 = vadd.f32 0.0, %v1107
        %v1109 = vpop.f32.mrb[0].mxu0
        %1110 = vdwg.mxu0
        %v1111 = vadd.f32 %v959, %v1108
        %1112 = vrot.lane.b32.xlu0 %v296, 40
        %v1113 = vpop.permute.xlu0 %1112
        %v1116 = vsel %vm307, %v663, 0
        %1118 = vmatprep.subr.mxu0 0.0
        %1119 = vmatpush1.msra.mxu0 %v1113
        %1120 = vmatprep.subr.mxu0 0.0
        %1121 = vmatpush1.msra.mxu0 0.0
        %1122 = vmatprep.subr.mxu0 0.0
        %1123 = vmatpush1.msra.mxu0 0.0
        %1124 = vmatprep.subr.mxu0 0.0
        %1125 = vmatpush1.msra.mxu0 0.0
        %1126 = vmatprep.subr.mxu0 0.0
        %1127 = vmatpush1.msra.mxu0 0.0
        %1128 = vmatprep.subr.mxu0 0.0
        %1129 = vmatpush1.msra.mxu0 0.0
        %1130 = vmatprep.subr.mxu0 0.0
        %1131 = vmatpush1.msra.mxu0 0.0
        %1132 = vmatprep.subr.mxu0 0.0
        %1133 = vmatpush1.msra.mxu0 0.0
        %1134 = vmatprep.subr.mxu0 0.0
        %1135 = vmatpush1.msra.mxu0 0.0
        %1136 = vmatprep.subr.mxu0 0.0
        %1137 = vmatpush1.msra.mxu0 0.0
        %1138 = vmatprep.subr.mxu0 0.0
        %1139 = vmatpush1.msra.mxu0 0.0
        %1140 = vmatprep.subr.mxu0 0.0
        %1141 = vmatpush1.msra.mxu0 0.0
        %1142 = vmatprep.subr.mxu0 0.0
        %1143 = vmatpush1.msra.mxu0 0.0
        %1144 = vmatprep.subr.mxu0 0.0
        %1145 = vmatpush1.msra.mxu0 0.0
        %1146 = vmatprep.subr.mxu0 0.0
        %1147 = vmatpush1.msra.mxu0 0.0
        %1148 = vmatprep.subr.mxu0 0.0
        %1149 = vmatpush1.msra.mxu0 0.0
        %1150 = vmatprep.subr.mxu0 0.0
        %1151 = vmatpush1.msra.mxu0 0.0
        %1152 = vmatprep.subr.mxu0 0.0
        %1153 = vmatpush1.msra.mxu0 0.0
        %1154 = vmatprep.subr.mxu0 0.0
        %1155 = vmatpush1.msra.mxu0 0.0
        %1156 = vmatprep.subr.mxu0 0.0
        %1157 = vmatpush1.msra.mxu0 0.0
        %1158 = vmatprep.subr.mxu0 0.0
        %1159 = vmatpush1.msra.mxu0 0.0
        %1160 = vmatprep.subr.mxu0 0.0
        %1161 = vmatpush1.msra.mxu0 0.0
        %1162 = vmatprep.subr.mxu0 0.0
        %1163 = vmatpush1.msra.mxu0 0.0
        %1164 = vmatprep.subr.mxu0 0.0
        %1165 = vmatpush1.msra.mxu0 0.0
        %1166 = vmatprep.subr.mxu0 0.0
        %1167 = vmatpush1.msra.mxu0 0.0
        %1168 = vmatprep.subr.mxu0 0.0
        %1169 = vmatpush1.msra.mxu0 0.0
        %1170 = vmatprep.subr.mxu0 0.0
        %1171 = vmatpush1.msra.mxu0 0.0
        %1172 = vmatprep.subr.mxu0 0.0
        %1173 = vmatpush1.msra.mxu0 0.0
        %1174 = vmatprep.subr.mxu0 0.0
        %1175 = vmatpush1.msra.mxu0 0.0
        %1176 = vmatprep.subr.mxu0 0.0
        %1177 = vmatpush1.msra.mxu0 0.0
        %1178 = vmatprep.subr.mxu0 0.0
        %1179 = vmatpush1.msra.mxu0 0.0
        %1180 = vmatprep.subr.mxu0 0.0
        %1181 = vmatpush1.msra.mxu0 0.0
        %1182 = vmatprep.mubr.f32.mxu0 0.0
        %1183 = vmatmul.mubr.f32.gmra.mrb[0].mxu0 %v1116
        %v1184 = vpop.f32.mrb[0].mxu0
        %v1185 = vadd.f32 0.0, %v1184
        %v1186 = vpop.f32.mrb[0].mxu0
        %1187 = vdwg.mxu0
        %v1189 = vsel %vm307, %v1185, 0
        %1191 = vmatprep.subr.mxu0 0.0
        %1192 = vmatpush1.msra.mxu0 %v182
        %1193 = vmatprep.subr.mxu0 0.0
        %1194 = vmatpush1.msra.mxu0 0.0
        %1195 = vmatprep.subr.mxu0 0.0
        %1196 = vmatpush1.msra.mxu0 0.0
        %1197 = vmatprep.subr.mxu0 0.0
        %1198 = vmatpush1.msra.mxu0 0.0
        %1199 = vmatprep.subr.mxu0 0.0
        %1200 = vmatpush1.msra.mxu0 0.0
        %1201 = vmatprep.subr.mxu0 0.0
        %1202 = vmatpush1.msra.mxu0 0.0
        %1203 = vmatprep.subr.mxu0 0.0
        %1204 = vmatpush1.msra.mxu0 0.0
        %1205 = vmatprep.subr.mxu0 0.0
        %1206 = vmatpush1.msra.mxu0 0.0
        %1207 = vmatprep.subr.mxu0 0.0
        %1208 = vmatpush1.msra.mxu0 0.0
        %1209 = vmatprep.subr.mxu0 0.0
        %1210 = vmatpush1.msra.mxu0 0.0
        %1211 = vmatprep.subr.mxu0 0.0
        %1212 = vmatpush1.msra.mxu0 0.0
        %1213 = vmatprep.subr.mxu0 0.0
        %1214 = vmatpush1.msra.mxu0 0.0
        %1215 = vmatprep.subr.mxu0 0.0
        %1216 = vmatpush1.msra.mxu0 0.0
        %1217 = vmatprep.subr.mxu0 0.0
        %1218 = vmatpush1.msra.mxu0 0.0
        %1219 = vmatprep.subr.mxu0 0.0
        %1220 = vmatpush1.msra.mxu0 0.0
        %1221 = vmatprep.subr.mxu0 0.0
        %1222 = vmatpush1.msra.mxu0 0.0
        %1223 = vmatprep.subr.mxu0 0.0
        %1224 = vmatpush1.msra.mxu0 0.0
        %1225 = vmatprep.subr.mxu0 0.0
        %1226 = vmatpush1.msra.mxu0 0.0
        %1227 = vmatprep.subr.mxu0 0.0
        %1228 = vmatpush1.msra.mxu0 0.0
        %1229 = vmatprep.subr.mxu0 0.0
        %1230 = vmatpush1.msra.mxu0 0.0
        %1231 = vmatprep.subr.mxu0 0.0
        %1232 = vmatpush1.msra.mxu0 0.0
        %1233 = vmatprep.subr.mxu0 0.0
        %1234 = vmatpush1.msra.mxu0 0.0
        %1235 = vmatprep.subr.mxu0 0.0
        %1236 = vmatpush1.msra.mxu0 0.0
        %1237 = vmatprep.subr.mxu0 0.0
        %1238 = vmatpush1.msra.mxu0 0.0
        %1239 = vmatprep.subr.mxu0 0.0
        %1240 = vmatpush1.msra.mxu0 0.0
        %1241 = vmatprep.subr.mxu0 0.0
        %1242 = vmatpush1.msra.mxu0 0.0
        %1243 = vmatprep.subr.mxu0 0.0
        %1244 = vmatpush1.msra.mxu0 0.0
        %1245 = vmatprep.subr.mxu0 0.0
        %1246 = vmatpush1.msra.mxu0 0.0
        %1247 = vmatprep.subr.mxu0 0.0
        %1248 = vmatpush1.msra.mxu0 0.0
        %1249 = vmatprep.subr.mxu0 0.0
        %1250 = vmatpush1.msra.mxu0 0.0
        %1251 = vmatprep.subr.mxu0 0.0
        %1252 = vmatpush1.msra.mxu0 0.0
        %1253 = vmatprep.subr.mxu0 0.0
        %1254 = vmatpush1.msra.mxu0 0.0
        %1255 = vmatprep.mubr.f32.mxu0 0.0
        %1256 = vmatmul.mubr.f32.gmra.mrb[0].mxu0 %v1189
        %v1257 = vpop.f32.mrb[0].mxu0
        %v1258 = vadd.f32 0.0, %v1257
        %v1259 = vpop.f32.mrb[0].mxu0
        %1260 = vdwg.mxu0
        %v1261 = vadd.f32 %v1111, %v1258
        %v1262 = vadd.f32 %v174, %v1261
        %v1263 = vlaneseq
        %v1264 = vshrl.u32 %v1263, 7
        %v1265 = vsub.s32 0, %v1264
        %v1266 = vrot.slane %v204, %v1265
        %v1267 = vadd.f32 %v1262, %v1266
        %v1268 = vsel %vm207, %v1267, 0.0
        %1269 = vadd.xlane.f32.xlu0 %v1268
        %v1270 = vpop.xlane.xlu0 %1269
        %v1271 = vmul.f32 %v1270, %v211
        %v1272 = vsub.f32 %v1267, %v1271
        %v1273 = vmul.f32 %v1272, %v1272
        %v1274 = vsel %vm207, %v1273, 0.0
        %1275 = vadd.xlane.f32.xlu0 %v1274
        %v1276 = vpop.xlane.xlu0 %1275
        %v1277 = vmul.f32 %v1276, %v211
        %v1278 = vadd.f32 %v1277, 1e-05
        %v1279 = vrsqrt.pop %v1278
        %v1280 = vmul.f32 %v1272, %v1279
        %v1281 = vlaneseq
        %v1282 = vshrl.u32 %v1281, 7
        %v1283 = vsub.s32 0, %v1282
        %v1284 = vrot.slane %v205, %v1283
        %v1286 = vsel %vm207, %v1280, 0
        %1288 = vmatprep.subr.mxu0 0.0
        %1289 = vmatpush1.msra.mxu0 %v183
        %1290 = vmatprep.subr.mxu0 0.0
        %1291 = vmatpush1.msra.mxu0 %v184
        %1292 = vmatprep.subr.mxu0 0.0
        %1293 = vmatpush1.msra.mxu0 %v185
        %1294 = vmatprep.subr.mxu0 0.0
        %1295 = vmatpush1.msra.mxu0 %v186
        %1296 = vmatprep.subr.mxu0 0.0
        %1297 = vmatpush1.msra.mxu0 0.0
        %1298 = vmatprep.subr.mxu0 0.0
        %1299 = vmatpush1.msra.mxu0 0.0
        %1300 = vmatprep.subr.mxu0 0.0
        %1301 = vmatpush1.msra.mxu0 0.0
        %1302 = vmatprep.subr.mxu0 0.0
        %1303 = vmatpush1.msra.mxu0 0.0
        %1304 = vmatprep.subr.mxu0 0.0
        %1305 = vmatpush1.msra.mxu0 0.0
        %1306 = vmatprep.subr.mxu0 0.0
        %1307 = vmatpush1.msra.mxu0 0.0
        %1308 = vmatprep.subr.mxu0 0.0
        %1309 = vmatpush1.msra.mxu0 0.0
        %1310 = vmatprep.subr.mxu0 0.0
        %1311 = vmatpush1.msra.mxu0 0.0
        %1312 = vmatprep.subr.mxu0 0.0
        %1313 = vmatpush1.msra.mxu0 0.0
        %1314 = vmatprep.subr.mxu0 0.0
        %1315 = vmatpush1.msra.mxu0 0.0
        %1316 = vmatprep.subr.mxu0 0.0
        %1317 = vmatpush1.msra.mxu0 0.0
        %1318 = vmatprep.subr.mxu0 0.0
        %1319 = vmatpush1.msra.mxu0 0.0
        %1320 = vmatprep.subr.mxu0 0.0
        %1321 = vmatpush1.msra.mxu0 0.0
        %1322 = vmatprep.subr.mxu0 0.0
        %1323 = vmatpush1.msra.mxu0 0.0
        %1324 = vmatprep.subr.mxu0 0.0
        %1325 = vmatpush1.msra.mxu0 0.0
        %1326 = vmatprep.subr.mxu0 0.0
        %1327 = vmatpush1.msra.mxu0 0.0
        %1328 = vmatprep.subr.mxu0 0.0
        %1329 = vmatpush1.msra.mxu0 0.0
        %1330 = vmatprep.subr.mxu0 0.0
        %1331 = vmatpush1.msra.mxu0 0.0
        %1332 = vmatprep.subr.mxu0 0.0
        %1333 = vmatpush1.msra.mxu0 0.0
        %1334 = vmatprep.subr.mxu0 0.0
        %1335 = vmatpush1.msra.mxu0 0.0
        %1336 = vmatprep.subr.mxu0 0.0
        %1337 = vmatpush1.msra.mxu0 0.0
        %1338 = vmatprep.subr.mxu0 0.0
        %1339 = vmatpush1.msra.mxu0 0.0
        %1340 = vmatprep.subr.mxu0 0.0
        %1341 = vmatpush1.msra.mxu0 0.0
        %1342 = vmatprep.subr.mxu0 0.0
        %1343 = vmatpush1.msra.mxu0 0.0
        %1344 = vmatprep.subr.mxu0 0.0
        %1345 = vmatpush1.msra.mxu0 0.0
        %1346 = vmatprep.subr.mxu0 0.0
        %1347 = vmatpush1.msra.mxu0 0.0
        %1348 = vmatprep.subr.mxu0 0.0
        %1349 = vmatpush1.msra.mxu0 0.0
        %1350 = vmatprep.subr.mxu0 0.0
        %1351 = vmatpush1.msra.mxu0 0.0
        %1352 = vmatprep.mubr.f32.mxu0 0.0
        %1353 = vmatmul.mubr.f32.gmra.mrb[0].mxu0 %v1286
        %v1354 = vpop.f32.mrb[0].mxu0
        %v1355 = vadd.f32 %v1284, %v1354
        %v1356 = vpop.f32.mrb[0].mxu0
        %1357 = vdwg.mxu0
        %v1358 = vmul.f32 %v1355, 0.5
        %v1359 = vmul.f32 %v1355, 0.044715
        %v1360 = vmul.f32 %v1359, %v1355
        %v1361 = vmul.f32 %v1360, %v1355
        %v1362 = vadd.f32 %v1355, %v1361
        %v1363 = vmul.f32 %v1362, 0.7978846
        %v1364 = vtanh.pop %v1363
        %v1365 = vadd.f32 %v1364, 1.0
        %v1366 = vmul.f32 %v1358, %v1365
        %v1367 = vlaneseq
        %v1368 = vshrl.u32 %v1367, 7
        %v1369 = vsub.s32 0, %v1368
        %v1370 = vrot.slane %v206, %v1369
        %1371 = vmatprep.subr.mxu0 0.0
        %1372 = vmatpush1.msra.mxu0 %v187
        %1373 = vmatprep.subr.mxu0 0.0
        %1374 = vmatpush1.msra.mxu0 %v188
        %1375 = vmatprep.subr.mxu0 0.0
        %1376 = vmatpush1.msra.mxu0 %v189
        %1377 = vmatprep.subr.mxu0 0.0
        %1378 = vmatpush1.msra.mxu0 %v190
        %1379 = vmatprep.subr.mxu0 0.0
        %1380 = vmatpush1.msra.mxu0 %v191
        %1381 = vmatprep.subr.mxu0 0.0
        %1382 = vmatpush1.msra.mxu0 %v192
        %1383 = vmatprep.subr.mxu0 0.0
        %1384 = vmatpush1.msra.mxu0 %v193
        %1385 = vmatprep.subr.mxu0 0.0
        %1386 = vmatpush1.msra.mxu0 %v194
        %1387 = vmatprep.subr.mxu0 0.0
        %1388 = vmatpush1.msra.mxu0 %v195
        %1389 = vmatprep.subr.mxu0 0.0
        %1390 = vmatpush1.msra.mxu0 %v196
        %1391 = vmatprep.subr.mxu0 0.0
        %1392 = vmatpush1.msra.mxu0 %v197
        %1393 = vmatprep.subr.mxu0 0.0
        %1394 = vmatpush1.msra.mxu0 %v198
        %1395 = vmatprep.subr.mxu0 0.0
        %1396 = vmatpush1.msra.mxu0 %v199
        %1397 = vmatprep.subr.mxu0 0.0
        %1398 = vmatpush1.msra.mxu0 %v200
        %1399 = vmatprep.subr.mxu0 0.0
        %1400 = vmatpush1.msra.mxu0 %v201
        %1401 = vmatprep.subr.mxu0 0.0
        %1402 = vmatpush1.msra.mxu0 %v202
        %1403 = vmatprep.subr.mxu0 0.0
        %1404 = vmatpush1.msra.mxu0 0.0
        %1405 = vmatprep.subr.mxu0 0.0
        %1406 = vmatpush1.msra.mxu0 0.0
        %1407 = vmatprep.subr.mxu0 0.0
        %1408 = vmatpush1.msra.mxu0 0.0
        %1409 = vmatprep.subr.mxu0 0.0
        %1410 = vmatpush1.msra.mxu0 0.0
        %1411 = vmatprep.subr.mxu0 0.0
        %1412 = vmatpush1.msra.mxu0 0.0
        %1413 = vmatprep.subr.mxu0 0.0
        %1414 = vmatpush1.msra.mxu0 0.0
        %1415 = vmatprep.subr.mxu0 0.0
        %1416 = vmatpush1.msra.mxu0 0.0
        %1417 = vmatprep.subr.mxu0 0.0
        %1418 = vmatpush1.msra.mxu0 0.0
        %1419 = vmatprep.subr.mxu0 0.0
        %1420 = vmatpush1.msra.mxu0 0.0
        %1421 = vmatprep.subr.mxu0 0.0
        %1422 = vmatpush1.msra.mxu0 0.0
        %1423 = vmatprep.subr.mxu0 0.0
        %1424 = vmatpush1.msra.mxu0 0.0
        %1425 = vmatprep.subr.mxu0 0.0
        %1426 = vmatpush1.msra.mxu0 0.0
        %1427 = vmatprep.subr.mxu0 0.0
        %1428 = vmatpush1.msra.mxu0 0.0
        %1429 = vmatprep.subr.mxu0 0.0
        %1430 = vmatpush1.msra.mxu0 0.0
        %1431 = vmatprep.subr.mxu0 0.0
        %1432 = vmatpush1.msra.mxu0 0.0
        %1433 = vmatprep.subr.mxu0 0.0
        %1434 = vmatpush1.msra.mxu0 0.0
        %1435 = vmatprep.mubr.f32.mxu0 0.0
        %1436 = vmatmul.mubr.f32.gmra.mrb[0].mxu0 %v1366
        %v1437 = vpop.f32.mrb[0].mxu0
        %v1438 = vadd.f32 %v1370, %v1437
        %v1439 = vpop.f32.mrb[0].mxu0
        %1440 = vdwg.mxu0
        %v1441 = vadd.f32 %v1267, %v1438
        %1442 = vst.msk [vmem:[%s173] sm:$0xff] %vm207, %v1441
        %s1443 = sand.u32 %s75, 1
        %s1444 = scalar_lea.sflag [#allocation4], %s1443
        %s1445 = sand.u32 %s75, 1
        %s1446 = smul.addr %s1445, 8
        %s1447 = scalar_lea.vmem [#allocation7], %s1446
        // Predicated region
        $region37: #{gpt2_block.1} parent=27 // pred_check
          %p1448 = pneg %p85
        $region38: #{gpt2_block.1} parent=27 // pred_check_branch
          %1450 = sbr.rel (%p1448) target = $region40
        $region39: #{gpt2_block.1} parent=27 // pred_region
          %s1452 = ssub.s32 128, 128
          %1453 = vsyncadd %s1444, %s1452
          %s1454 = smul.addr %s20, 128
          %s1455 = scalar_lea.hbm %s2, %s1454
          %s1457 = sshll.u32 %s1447, 4
          %s1458 = int_to_ptr.vmem [resolvable:$true] %s1457
          %1460 = dma.vmem_to_hbm [thread:$0]  %s1458, 128, %s1455, %s1444
        $region40: #{gpt2_block.1} parent=27 // pred_fallthru
          _
      $region28: #{gpt2_block.1} parent=5 // pred_fallthru
        _
      %p1461 = scmp.le.s32.totalorder 2, %s15
      // Predicated region
      $region41: #{gpt2_block.1} parent=5 // pred_check
        %p1462 = pneg %p1461
      $region42: #{gpt2_block.1} parent=5 // pred_check_branch
        %1464 = sbr.rel (%p1462) target = $region44
      $region43: #{gpt2_block.1} parent=5 // pred_region
        %s1465 = ssub.s32 %s15, 2
        // Predicated region
        $region45: #{gpt2_block.1} parent=43 // pred_check
          %p1466 = pneg %p91
        $region46: #{gpt2_block.1} parent=43 // pred_check_branch
          %1468 = sbr.rel (%p1466) target = $region48
        $region47: #{gpt2_block.1} parent=43 // pred_region
          %s1469 = sand.u32 %s76, 1
          %s1470 = scalar_lea.sflag [#allocation4], %s1469
          %s1471 = sand.u32 %s76, 1
          %s1472 = smul.addr %s1471, 8
          %s1473 = scalar_lea.vmem [#allocation7], %s1472
          %1474 = dma.done %s1470, 128
        $region48: #{gpt2_block.1} parent=43 // pred_fallthru
          _
      $region44: #{gpt2_block.1} parent=5 // pred_fallthru
        _
    $region6: #{gpt2_block.1} parent=1 // loop_footer
      %s19 = sadd.s32 1, %s15
    $region7: #{gpt2_block.1} parent=1 // loop_footer_branch
      %14 = sbr.rel target = $region3
    $region8: #{gpt2_block.1} parent=1 // loop_exit
      _
    %1475 = vsyncpa [#allocation3], 1
    %s1476 = scalar_lea.sflag [#allocation3], 1
    %1477 = vsyncpa %s1476, 1
    %1478 = vsyncpa [#allocation6], 1
    %1479 = vsyncpa [#allocation4], 1
    %s1480 = scalar_lea.sflag [#allocation4], 1
    %1481 = vsyncpa %s1480, 1

</llo_original>
